<compile_context>
chip_gen: v7x
topology: tpu7x:2x2x1
jax: 0.10.0
libtpu: 0.0.40
codegen_flags: <defaults>
</compile_context>

<pallas_src>
import functools
import math

import jax
import jax.numpy as jnp
from jax.experimental import pallas as pl
from jax.experimental.pallas import tpu as pltpu


def _round_up(x, m):
    return (x + m - 1) // m * m


# ------------------------------------------------------------------ kernel ---
def _critic_kernel(sa_ref, w1_ref, b1_ref, w2_ref, b2_ref, w3_ref, b3_ref,
                   w4_ref, b4_ref, q_ref, *, e_blk, hidden, hidden_pad):
    """One (ensemble-block, batch-tile) grid step.

    sa_ref : [tB, Din]         state-action tile (re-streams along batch axis)
    w1_ref : [Din, e_blk*Hp]   layer-1 weights fused across the ensemble block,
    b1_ref : [1, e_blk*Hp]     each member's columns padded to Hp (128-aligned)
    w2_ref : [e_blk, H, H]     b2_ref : [e_blk, 1, H]
    w3_ref : [e_blk, H, H]     b3_ref : [e_blk, 1, H]
    w4_ref : [e_blk, 1, H]     lane-dense layer-4 weight rows
    b4_ref : [E]               (SMEM, scalar path)
    q_ref  : [1, tB, e_blk]    output block, written once per grid step
    """
    w_dtype = w2_ref.dtype
    x = sa_ref[...].astype(w_dtype)                              # [tB, Din]

    # ---- layer 1, fused across the ensemble block (MXU N = e_blk*Hp) -------
    h1 = jnp.dot(x, w1_ref[...], preferred_element_type=jnp.float32)
    h1 = jnp.maximum(h1 + b1_ref[...], 0.0)                     # [tB, e_blk*Hp]

    # ---- layers 2..4, per ensemble member (small static unroll) ------------
    e0 = pl.program_id(0) * e_blk
    cols = []
    for i in range(e_blk):
        # 128-aligned start; only the first `hidden` columns are real data.
        h = h1[:, i * hidden_pad:i * hidden_pad + hidden]        # [tB, H] f32

        h = jnp.dot(h.astype(w_dtype), w2_ref[i],
                    preferred_element_type=jnp.float32)
        h = jnp.maximum(h + b2_ref[i], 0.0)

        h = jnp.dot(h.astype(w_dtype), w3_ref[i],
                    preferred_element_type=jnp.float32)
        h = jnp.maximum(h + b3_ref[i], 0.0)

        # layer 4 (out_features == 1): VPU multiply + lane reduce.  keepdims
        # keeps the batch on the sublane axis (no per-member relayout/store).
        w4_row = w4_ref[i].astype(jnp.float32)                   # [1, H]
        q = jnp.sum(h * w4_row, axis=-1, keepdims=True)          # [tB, 1]
        cols.append(q + b4_ref[e0 + i])

    # one store per grid step for the whole ensemble block
    q_ref[0] = jnp.concatenate(cols, axis=-1).astype(q_ref.dtype)


# ------------------------------------------------------------- tile chooser ---
def _choose_e_blk(E, Din, H, Hp, budget_bytes=24 << 20):
    """Largest ensemble block whose double-buffered weight slab fits budget."""
    per_member = (Din * Hp + Hp + 2 * H * H + 3 * H) * 4   # conservative (f32)

    def fits(eb):
        return 2 * eb * per_member <= budget_bytes

    if fits(E):
        return E
    for eb in range(min(E, 8), 0, -1):
        if E % eb == 0 and fits(eb):
            return eb
    return 1


# -------------------------------------------------------------- param packer ---
def pack_params(params, *, weight_dtype=jnp.float32):
    """One-time repack of VectorizedCritic params for the Pallas kernel.

    Call once and reuse the result: the transposes / pads / dtype casts here
    would otherwise re-read and re-write the entire weight set in HBM on every
    forward call.
    """
    w1, b1 = params["w1"], params["b1"]          # [E, Din, H], [E, 1, H]
    w2, b2 = params["w2"], params["b2"]          # [E, H, H],   [E, 1, H]
    w3, b3 = params["w3"], params["b3"]          # [E, H, H],   [E, 1, H]
    w4, b4 = params["w4"], params["b4"]          # [E, H, 1],   [E, 1, 1]
    E, Din, H = w1.shape
    # per-member layer-1 column width, padded to a 128-lane boundary
    Hp = H if H % 128 == 0 else _round_up(H, 128)

    w1_p = jnp.pad(w1, ((0, 0), (0, 0), (0, Hp - H)))
    b1_p = jnp.pad(b1, ((0, 0), (0, 0), (0, Hp - H)))
    return {
        # layer-1 weights fused along the output dim (lane-dense, fills MXU N)
        "w1": jnp.transpose(w1_p, (1, 0, 2)).reshape(Din, E * Hp).astype(weight_dtype),
        "b1": jnp.transpose(b1_p, (1, 0, 2)).reshape(1, E * Hp).astype(jnp.float32),
        "w2": w2.astype(weight_dtype),
        "b2": b2.astype(jnp.float32),
        "w3": w3.astype(weight_dtype),
        "b3": b3.astype(jnp.float32),
        # layer-4 weight rows stored lane-dense as [E, 1, H]; bias flat (E,)
        "w4": jnp.transpose(w4, (0, 2, 1)).astype(weight_dtype),
        "b4": b4.reshape(E).astype(jnp.float32),
    }


# ----------------------------------------------------------------- wrapper ---
def vectorized_critic_forward(state, action, packed, *, batch_tile=256):
    """Equivalent of VectorizedCritic.forward(state, action) -> [E, B]."""
    w1_f, b1_f = packed["w1"], packed["b1"]
    w2, b2 = packed["w2"], packed["b2"]
    w3, b3 = packed["w3"], packed["b3"]
    w4, b4 = packed["w4"], packed["b4"]

    E, H, _ = w2.shape
    Din = w1_f.shape[0]
    Hp = w1_f.shape[1] // E
    w_dtype = w2.dtype
    w_bytes = jnp.dtype(w_dtype).itemsize

    sa = jnp.concatenate([state, action], axis=-1).astype(jnp.float32)
    B = sa.shape[0]
    assert sa.shape[1] == Din

    # ---- tile selection ------------------------------------------------------
    e_blk = _choose_e_blk(E, Din, H, Hp)
    tB = _round_up(B, 8) if B <= batch_tile else batch_tile
    B_pad = _round_up(B, tB)
    if B_pad != B:
        sa = jnp.pad(sa, ((0, B_pad - B), (0, 0)))
    grid = (E // e_blk, B_pad // tB)     # ensemble blocks OUTER, batch INNER

    # explicit VMEM budget for the chosen tiles (double-buffered in/out blocks
    # + activation temps), clamped to v7x's 64 MiB physical VMEM.
    in_bytes = (tB * Din * 4
                + Din * e_blk * Hp * w_bytes + e_blk * Hp * 4
                + 2 * e_blk * H * H * w_bytes + 2 * e_blk * H * 4
                + e_blk * H * w_bytes)
    out_bytes = tB * e_blk * 4
    act_bytes = tB * e_blk * Hp * 4 + 4 * tB * Hp * 4
    vmem_limit = 2 * (in_bytes + out_bytes) + 2 * act_bytes + (8 << 20)
    vmem_limit = min(max(int(vmem_limit), 16 << 20), 64 << 20)

    kernel = functools.partial(_critic_kernel, e_blk=e_blk, hidden=H,
                               hidden_pad=Hp)

    q = pl.pallas_call(
        kernel,
        out_shape=jax.ShapeDtypeStruct((E // e_blk, B_pad, e_blk), jnp.float32),
        grid_spec=pltpu.PrefetchScalarGridSpec(
            num_scalar_prefetch=0,
            grid=grid,
            in_specs=[
                # state-action tile: depends only on the batch-tile index
                pl.BlockSpec((tB, Din), lambda e, b: (b, 0)),
                # per-ensemble-block weights: constant along the batch axis,
                # so they stay VMEM-resident across all batch tiles.
                pl.BlockSpec((Din, e_blk * Hp), lambda e, b: (0, e)),   # w1
                pl.BlockSpec((1, e_blk * Hp), lambda e, b: (0, e)),     # b1
                pl.BlockSpec((e_blk, H, H), lambda e, b: (e, 0, 0)),    # w2
                pl.BlockSpec((e_blk, 1, H), lambda e, b: (e, 0, 0)),    # b2
                pl.BlockSpec((e_blk, H, H), lambda e, b: (e, 0, 0)),    # w3
                pl.BlockSpec((e_blk, 1, H), lambda e, b: (e, 0, 0)),    # b3
                pl.BlockSpec((e_blk, 1, H), lambda e, b: (e, 0, 0)),    # w4
                # layer-4 bias on the scalar path (no lane-padded VMEM tile)
                pl.BlockSpec(memory_space=pltpu.MemorySpace.SMEM),      # b4
            ],
            out_specs=pl.BlockSpec((1, tB, e_blk), lambda e, b: (e, b, 0)),
        ),
        compiler_params=pltpu.CompilerParams(
            dimension_semantics=("parallel", "parallel"),
            vmem_limit_bytes=vmem_limit),
    )(sa, w1_f, b1_f, w2, b2, w3, b3, w4, b4)

    # [G, B_pad, e_blk] -> [E, B]: trivial wrapper-side transpose/reshape.
    q = jnp.transpose(q, (0, 2, 1)).reshape(E, B_pad)
    return q[:, :B]


# ----------------------------------------------------------- parameter init ---
def init_params(key, state_dim, action_dim, hidden_dim, num_critics):
    """Deterministic init mirroring VectorizedLinear.reset_parameters
    (kaiming_uniform with a=sqrt(5) == U(-1/sqrt(fan_in), 1/sqrt(fan_in)))."""
    dims = [(state_dim + action_dim, hidden_dim),
            (hidden_dim, hidden_dim),
            (hidden_dim, hidden_dim),
            (hidden_dim, 1)]
    params = {}
    for i, (fin, fout) in enumerate(dims, start=1):
        key, kw, kb = jax.random.split(key, 3)
        bound = 1.0 / math.sqrt(fin)
        params[f"w{i}"] = jax.random.uniform(
            kw, (num_critics, fin, fout), jnp.float32, -bound, bound)
        params[f"b{i}"] = jax.random.uniform(
            kb, (num_critics, 1, fout), jnp.float32, -bound, bound)
    return params


def reference_forward(state, action, params):
    """Pure-JAX reference matching the PyTorch semantics."""
    sa = jnp.concatenate([state, action], axis=-1)
    E = params["w1"].shape[0]
    x = jnp.broadcast_to(sa[None], (E,) + sa.shape)
    x = jax.nn.relu(x @ params["w1"] + params["b1"])
    x = jax.nn.relu(x @ params["w2"] + params["b2"])
    x = jax.nn.relu(x @ params["w3"] + params["b3"])
    x = x @ params["w4"] + params["b4"]
    return x[..., 0]


# -------------------------------------------------------------------- main ---
if __name__ == "__main__":
    state_dim, action_dim, hidden_dim, num_critics = 8, 4, 64, 4
    batch = 8

    key = jax.random.PRNGKey(0)
    key, ks, ka = jax.random.split(key, 3)
    state = jax.random.normal(ks, (batch, state_dim), jnp.float32)
    action = jax.random.normal(ka, (batch, action_dim), jnp.float32)

    params = init_params(key, state_dim, action_dim, hidden_dim, num_critics)
    q_ref = reference_forward(state, action, params)

    fwd = jax.jit(vectorized_critic_forward)

    # f32 weights: exact-semantics path.  Packing runs ONCE, outside the step.
    packed_f32 = jax.block_until_ready(pack_params(params))
    q = jax.block_until_ready(fwd(state, action, packed_f32))
    assert q.shape == (num_critics, batch), q.shape
    assert jnp.allclose(q, q_ref, atol=1e-4, rtol=1e-4), "f32 mismatch vs reference"

    # bf16 weights (f32 bias/ReLU/accumulation): halves weight DMA — preferred
    # default on v5e where the small-batch regime is weight-DMA bound.
    # Tolerance is intentionally loose; verify acceptable for Q-value use.
    packed_bf16 = jax.block_until_ready(
        pack_params(params, weight_dtype=jnp.bfloat16))
    q_bf16 = jax.block_until_ready(fwd(state, action, packed_bf16))
    assert jnp.allclose(q_bf16, q_ref, atol=5e-2, rtol=5e-2), "bf16 mismatch vs reference"

    print("KERNEL_OK")
</pallas_src>

<mosaic_0001>
module attributes {stable_mosaic.version = 11 : i64} {
  func.func @_critic_kernel(%arg0: i32, %arg1: i32, %arg2: memref<8x12xf32, #tpu.memory_space<vmem>>, %arg3: memref<12x512xf32, #tpu.memory_space<vmem>>, %arg4: memref<1x512xf32, #tpu.memory_space<vmem>>, %arg5: memref<4x64x64xf32, #tpu.memory_space<vmem>>, %arg6: memref<4x1x64xf32, #tpu.memory_space<vmem>>, %arg7: memref<4x64x64xf32, #tpu.memory_space<vmem>>, %arg8: memref<4x1x64xf32, #tpu.memory_space<vmem>>, %arg9: memref<4x1x64xf32, #tpu.memory_space<vmem>>, %arg10: memref<4xf32, #tpu.memory_space<smem>>, %arg11: memref<1x8x4xf32, #tpu.memory_space<vmem>>) attributes {dimension_semantics = [#tpu.dimension_semantics<parallel>, #tpu.dimension_semantics<parallel>], iteration_bounds = array<i64: 1, 1>, scalar_prefetch = 0 : i64, scratch_operands = 0 : i64, tpu.core_type = #tpu.core_type<tc>, window_params = [{transform_indices = @transform_0, window_bounds = array<i64: 8, 12>}, {transform_indices = @transform_1, window_bounds = array<i64: 12, 512>}, {transform_indices = @transform_2, window_bounds = array<i64: 1, 512>}, {transform_indices = @transform_3, window_bounds = array<i64: 4, 64, 64>}, {transform_indices = @transform_4, window_bounds = array<i64: 4, 1, 64>}, {transform_indices = @transform_5, window_bounds = array<i64: 4, 64, 64>}, {transform_indices = @transform_6, window_bounds = array<i64: 4, 1, 64>}, {transform_indices = @transform_7, window_bounds = array<i64: 4, 1, 64>}, {transform_indices = @transform_8, window_bounds = array<i64: 4>}, {transform_indices = @transform_9, window_bounds = array<i64: 1, 8, 4>}]} {
    %c0 = arith.constant 0 : index
    %c0_0 = arith.constant 0 : index
    %0 = vector.load %arg2[%c0, %c0_0] : memref<8x12xf32, #tpu.memory_space<vmem>>, vector<8x12xf32>
    %c0_1 = arith.constant 0 : index
    %c0_2 = arith.constant 0 : index
    %1 = vector.load %arg3[%c0_1, %c0_2] : memref<12x512xf32, #tpu.memory_space<vmem>>, vector<12x512xf32>
    %cst = arith.constant dense<0.000000e+00> : vector<8x512xf32>
    %2 = tpu.matmul %0, %1, %cst {dimension_numbers = #tpu.dot_dimension_numbers<[1], [0], [0], [1], [0, 0, 1, 1], [], []>} : vector<8x12xf32>, vector<12x512xf32>, vector<8x512xf32> -> vector<8x512xf32>
    %c0_3 = arith.constant 0 : index
    %c0_4 = arith.constant 0 : index
    %3 = vector.load %arg4[%c0_3, %c0_4] : memref<1x512xf32, #tpu.memory_space<vmem>>, vector<1x512xf32>
    %4 = vector.broadcast %3 : vector<1x512xf32> to vector<8x512xf32>
    %5 = arith.addf %2, %4 : vector<8x512xf32>
    %cst_5 = arith.constant 0.000000e+00 : f32
    %6 = vector.broadcast %cst_5 : f32 to vector<8x512xf32>
    %7 = arith.maximumf %5, %6 : vector<8x512xf32>
    %c4_i32 = arith.constant 4 : i32
    %8 = arith.muli %arg0, %c4_i32 : i32
    %9 = vector.extract_strided_slice %7 {offsets = [0, 0], sizes = [8, 64], strides = [1, 1]} : vector<8x512xf32> to vector<8x64xf32>
    %c0_6 = arith.constant 0 : index
    %c0_7 = arith.constant 0 : index
    %c0_8 = arith.constant 0 : index
    %10 = vector.load %arg5[%c0_6, %c0_7, %c0_8] : memref<4x64x64xf32, #tpu.memory_space<vmem>>, vector<1x64x64xf32>
    %11 = vector.shape_cast %10 : vector<1x64x64xf32> to vector<64x64xf32>
    %cst_9 = arith.constant dense<0.000000e+00> : vector<8x64xf32>
    %12 = tpu.matmul %9, %11, %cst_9 {dimension_numbers = #tpu.dot_dimension_numbers<[1], [0], [0], [1], [0, 0, 1, 1], [], []>} : vector<8x64xf32>, vector<64x64xf32>, vector<8x64xf32> -> vector<8x64xf32>
    %c0_10 = arith.constant 0 : index
    %c0_11 = arith.constant 0 : index
    %c0_12 = arith.constant 0 : index
    %13 = vector.load %arg6[%c0_10, %c0_11, %c0_12] : memref<4x1x64xf32, #tpu.memory_space<vmem>>, vector<1x1x64xf32>
    %14 = vector.shape_cast %13 : vector<1x1x64xf32> to vector<1x64xf32>
    %15 = vector.broadcast %14 : vector<1x64xf32> to vector<8x64xf32>
    %16 = arith.addf %12, %15 : vector<8x64xf32>
    %cst_13 = arith.constant 0.000000e+00 : f32
    %17 = vector.broadcast %cst_13 : f32 to vector<8x64xf32>
    %18 = arith.maximumf %16, %17 : vector<8x64xf32>
    %c0_14 = arith.constant 0 : index
    %c0_15 = arith.constant 0 : index
    %c0_16 = arith.constant 0 : index
    %19 = vector.load %arg7[%c0_14, %c0_15, %c0_16] : memref<4x64x64xf32, #tpu.memory_space<vmem>>, vector<1x64x64xf32>
    %20 = vector.shape_cast %19 : vector<1x64x64xf32> to vector<64x64xf32>
    %cst_17 = arith.constant dense<0.000000e+00> : vector<8x64xf32>
    %21 = tpu.matmul %18, %20, %cst_17 {dimension_numbers = #tpu.dot_dimension_numbers<[1], [0], [0], [1], [0, 0, 1, 1], [], []>} : vector<8x64xf32>, vector<64x64xf32>, vector<8x64xf32> -> vector<8x64xf32>
    %c0_18 = arith.constant 0 : index
    %c0_19 = arith.constant 0 : index
    %c0_20 = arith.constant 0 : index
    %22 = vector.load %arg8[%c0_18, %c0_19, %c0_20] : memref<4x1x64xf32, #tpu.memory_space<vmem>>, vector<1x1x64xf32>
    %23 = vector.shape_cast %22 : vector<1x1x64xf32> to vector<1x64xf32>
    %24 = vector.broadcast %23 : vector<1x64xf32> to vector<8x64xf32>
    %25 = arith.addf %21, %24 : vector<8x64xf32>
    %cst_21 = arith.constant 0.000000e+00 : f32
    %26 = vector.broadcast %cst_21 : f32 to vector<8x64xf32>
    %27 = arith.maximumf %25, %26 : vector<8x64xf32>
    %c0_22 = arith.constant 0 : index
    %c0_23 = arith.constant 0 : index
    %c0_24 = arith.constant 0 : index
    %28 = vector.load %arg9[%c0_22, %c0_23, %c0_24] : memref<4x1x64xf32, #tpu.memory_space<vmem>>, vector<1x1x64xf32>
    %29 = vector.shape_cast %28 : vector<1x1x64xf32> to vector<1x64xf32>
    %30 = vector.broadcast %29 : vector<1x64xf32> to vector<8x64xf32>
    %31 = arith.mulf %27, %30 : vector<8x64xf32>
    %cst_25 = arith.constant dense<0.000000e+00> : vector<8xf32>
    %32 = vector.multi_reduction <add>, %31, %cst_25 [1] : vector<8x64xf32> to vector<8xf32>
    %33 = vector.shape_cast %32 : vector<8xf32> to vector<8x1xf32>
    %c0_i32 = arith.constant 0 : i32
    %34 = arith.addi %8, %c0_i32 : i32
    %35 = arith.index_cast %34 : i32 to index
    %36 = memref.load %arg10[%35] : memref<4xf32, #tpu.memory_space<smem>>
    %37 = vector.broadcast %36 : f32 to vector<8x1xf32>
    %38 = arith.addf %33, %37 : vector<8x1xf32>
    %39 = vector.extract_strided_slice %7 {offsets = [0, 128], sizes = [8, 64], strides = [1, 1]} : vector<8x512xf32> to vector<8x64xf32>
    %c1 = arith.constant 1 : index
    %c0_26 = arith.constant 0 : index
    %c0_27 = arith.constant 0 : index
    %40 = vector.load %arg5[%c1, %c0_26, %c0_27] : memref<4x64x64xf32, #tpu.memory_space<vmem>>, vector<1x64x64xf32>
    %41 = vector.shape_cast %40 : vector<1x64x64xf32> to vector<64x64xf32>
    %cst_28 = arith.constant dense<0.000000e+00> : vector<8x64xf32>
    %42 = tpu.matmul %39, %41, %cst_28 {dimension_numbers = #tpu.dot_dimension_numbers<[1], [0], [0], [1], [0, 0, 1, 1], [], []>} : vector<8x64xf32>, vector<64x64xf32>, vector<8x64xf32> -> vector<8x64xf32>
    %c1_29 = arith.constant 1 : index
    %c0_30 = arith.constant 0 : index
    %c0_31 = arith.constant 0 : index
    %43 = vector.load %arg6[%c1_29, %c0_30, %c0_31] : memref<4x1x64xf32, #tpu.memory_space<vmem>>, vector<1x1x64xf32>
    %44 = vector.shape_cast %43 : vector<1x1x64xf32> to vector<1x64xf32>
    %45 = vector.broadcast %44 : vector<1x64xf32> to vector<8x64xf32>
    %46 = arith.addf %42, %45 : vector<8x64xf32>
    %cst_32 = arith.constant 0.000000e+00 : f32
    %47 = vector.broadcast %cst_32 : f32 to vector<8x64xf32>
    %48 = arith.maximumf %46, %47 : vector<8x64xf32>
    %c1_33 = arith.constant 1 : index
    %c0_34 = arith.constant 0 : index
    %c0_35 = arith.constant 0 : index
    %49 = vector.load %arg7[%c1_33, %c0_34, %c0_35] : memref<4x64x64xf32, #tpu.memory_space<vmem>>, vector<1x64x64xf32>
    %50 = vector.shape_cast %49 : vector<1x64x64xf32> to vector<64x64xf32>
    %cst_36 = arith.constant dense<0.000000e+00> : vector<8x64xf32>
    %51 = tpu.matmul %48, %50, %cst_36 {dimension_numbers = #tpu.dot_dimension_numbers<[1], [0], [0], [1], [0, 0, 1, 1], [], []>} : vector<8x64xf32>, vector<64x64xf32>, vector<8x64xf32> -> vector<8x64xf32>
    %c1_37 = arith.constant 1 : index
    %c0_38 = arith.constant 0 : index
    %c0_39 = arith.constant 0 : index
    %52 = vector.load %arg8[%c1_37, %c0_38, %c0_39] : memref<4x1x64xf32, #tpu.memory_space<vmem>>, vector<1x1x64xf32>
    %53 = vector.shape_cast %52 : vector<1x1x64xf32> to vector<1x64xf32>
    %54 = vector.broadcast %53 : vector<1x64xf32> to vector<8x64xf32>
    %55 = arith.addf %51, %54 : vector<8x64xf32>
    %cst_40 = arith.constant 0.000000e+00 : f32
    %56 = vector.broadcast %cst_40 : f32 to vector<8x64xf32>
    %57 = arith.maximumf %55, %56 : vector<8x64xf32>
    %c1_41 = arith.constant 1 : index
    %c0_42 = arith.constant 0 : index
    %c0_43 = arith.constant 0 : index
    %58 = vector.load %arg9[%c1_41, %c0_42, %c0_43] : memref<4x1x64xf32, #tpu.memory_space<vmem>>, vector<1x1x64xf32>
    %59 = vector.shape_cast %58 : vector<1x1x64xf32> to vector<1x64xf32>
    %60 = vector.broadcast %59 : vector<1x64xf32> to vector<8x64xf32>
    %61 = arith.mulf %57, %60 : vector<8x64xf32>
    %cst_44 = arith.constant dense<0.000000e+00> : vector<8xf32>
    %62 = vector.multi_reduction <add>, %61, %cst_44 [1] : vector<8x64xf32> to vector<8xf32>
    %63 = vector.shape_cast %62 : vector<8xf32> to vector<8x1xf32>
    %c1_i32 = arith.constant 1 : i32
    %64 = arith.addi %8, %c1_i32 : i32
    %65 = arith.index_cast %64 : i32 to index
    %66 = memref.load %arg10[%65] : memref<4xf32, #tpu.memory_space<smem>>
    %67 = vector.broadcast %66 : f32 to vector<8x1xf32>
    %68 = arith.addf %63, %67 : vector<8x1xf32>
    %69 = vector.extract_strided_slice %7 {offsets = [0, 256], sizes = [8, 64], strides = [1, 1]} : vector<8x512xf32> to vector<8x64xf32>
    %c2 = arith.constant 2 : index
    %c0_45 = arith.constant 0 : index
    %c0_46 = arith.constant 0 : index
    %70 = vector.load %arg5[%c2, %c0_45, %c0_46] : memref<4x64x64xf32, #tpu.memory_space<vmem>>, vector<1x64x64xf32>
    %71 = vector.shape_cast %70 : vector<1x64x64xf32> to vector<64x64xf32>
    %cst_47 = arith.constant dense<0.000000e+00> : vector<8x64xf32>
    %72 = tpu.matmul %69, %71, %cst_47 {dimension_numbers = #tpu.dot_dimension_numbers<[1], [0], [0], [1], [0, 0, 1, 1], [], []>} : vector<8x64xf32>, vector<64x64xf32>, vector<8x64xf32> -> vector<8x64xf32>
    %c2_48 = arith.constant 2 : index
    %c0_49 = arith.constant 0 : index
    %c0_50 = arith.constant 0 : index
    %73 = vector.load %arg6[%c2_48, %c0_49, %c0_50] : memref<4x1x64xf32, #tpu.memory_space<vmem>>, vector<1x1x64xf32>
    %74 = vector.shape_cast %73 : vector<1x1x64xf32> to vector<1x64xf32>
    %75 = vector.broadcast %74 : vector<1x64xf32> to vector<8x64xf32>
    %76 = arith.addf %72, %75 : vector<8x64xf32>
    %cst_51 = arith.constant 0.000000e+00 : f32
    %77 = vector.broadcast %cst_51 : f32 to vector<8x64xf32>
    %78 = arith.maximumf %76, %77 : vector<8x64xf32>
    %c2_52 = arith.constant 2 : index
    %c0_53 = arith.constant 0 : index
    %c0_54 = arith.constant 0 : index
    %79 = vector.load %arg7[%c2_52, %c0_53, %c0_54] : memref<4x64x64xf32, #tpu.memory_space<vmem>>, vector<1x64x64xf32>
    %80 = vector.shape_cast %79 : vector<1x64x64xf32> to vector<64x64xf32>
    %cst_55 = arith.constant dense<0.000000e+00> : vector<8x64xf32>
    %81 = tpu.matmul %78, %80, %cst_55 {dimension_numbers = #tpu.dot_dimension_numbers<[1], [0], [0], [1], [0, 0, 1, 1], [], []>} : vector<8x64xf32>, vector<64x64xf32>, vector<8x64xf32> -> vector<8x64xf32>
    %c2_56 = arith.constant 2 : index
    %c0_57 = arith.constant 0 : index
    %c0_58 = arith.constant 0 : index
    %82 = vector.load %arg8[%c2_56, %c0_57, %c0_58] : memref<4x1x64xf32, #tpu.memory_space<vmem>>, vector<1x1x64xf32>
    %83 = vector.shape_cast %82 : vector<1x1x64xf32> to vector<1x64xf32>
    %84 = vector.broadcast %83 : vector<1x64xf32> to vector<8x64xf32>
    %85 = arith.addf %81, %84 : vector<8x64xf32>
    %cst_59 = arith.constant 0.000000e+00 : f32
    %86 = vector.broadcast %cst_59 : f32 to vector<8x64xf32>
    %87 = arith.maximumf %85, %86 : vector<8x64xf32>
    %c2_60 = arith.constant 2 : index
    %c0_61 = arith.constant 0 : index
    %c0_62 = arith.constant 0 : index
    %88 = vector.load %arg9[%c2_60, %c0_61, %c0_62] : memref<4x1x64xf32, #tpu.memory_space<vmem>>, vector<1x1x64xf32>
    %89 = vector.shape_cast %88 : vector<1x1x64xf32> to vector<1x64xf32>
    %90 = vector.broadcast %89 : vector<1x64xf32> to vector<8x64xf32>
    %91 = arith.mulf %87, %90 : vector<8x64xf32>
    %cst_63 = arith.constant dense<0.000000e+00> : vector<8xf32>
    %92 = vector.multi_reduction <add>, %91, %cst_63 [1] : vector<8x64xf32> to vector<8xf32>
    %93 = vector.shape_cast %92 : vector<8xf32> to vector<8x1xf32>
    %c2_i32 = arith.constant 2 : i32
    %94 = arith.addi %8, %c2_i32 : i32
    %95 = arith.index_cast %94 : i32 to index
    %96 = memref.load %arg10[%95] : memref<4xf32, #tpu.memory_space<smem>>
    %97 = vector.broadcast %96 : f32 to vector<8x1xf32>
    %98 = arith.addf %93, %97 : vector<8x1xf32>
    %99 = vector.extract_strided_slice %7 {offsets = [0, 384], sizes = [8, 64], strides = [1, 1]} : vector<8x512xf32> to vector<8x64xf32>
    %c3 = arith.constant 3 : index
    %c0_64 = arith.constant 0 : index
    %c0_65 = arith.constant 0 : index
    %100 = vector.load %arg5[%c3, %c0_64, %c0_65] : memref<4x64x64xf32, #tpu.memory_space<vmem>>, vector<1x64x64xf32>
    %101 = vector.shape_cast %100 : vector<1x64x64xf32> to vector<64x64xf32>
    %cst_66 = arith.constant dense<0.000000e+00> : vector<8x64xf32>
    %102 = tpu.matmul %99, %101, %cst_66 {dimension_numbers = #tpu.dot_dimension_numbers<[1], [0], [0], [1], [0, 0, 1, 1], [], []>} : vector<8x64xf32>, vector<64x64xf32>, vector<8x64xf32> -> vector<8x64xf32>
    %c3_67 = arith.constant 3 : index
    %c0_68 = arith.constant 0 : index
    %c0_69 = arith.constant 0 : index
    %103 = vector.load %arg6[%c3_67, %c0_68, %c0_69] : memref<4x1x64xf32, #tpu.memory_space<vmem>>, vector<1x1x64xf32>
    %104 = vector.shape_cast %103 : vector<1x1x64xf32> to vector<1x64xf32>
    %105 = vector.broadcast %104 : vector<1x64xf32> to vector<8x64xf32>
    %106 = arith.addf %102, %105 : vector<8x64xf32>
    %cst_70 = arith.constant 0.000000e+00 : f32
    %107 = vector.broadcast %cst_70 : f32 to vector<8x64xf32>
    %108 = arith.maximumf %106, %107 : vector<8x64xf32>
    %c3_71 = arith.constant 3 : index
    %c0_72 = arith.constant 0 : index
    %c0_73 = arith.constant 0 : index
    %109 = vector.load %arg7[%c3_71, %c0_72, %c0_73] : memref<4x64x64xf32, #tpu.memory_space<vmem>>, vector<1x64x64xf32>
    %110 = vector.shape_cast %109 : vector<1x64x64xf32> to vector<64x64xf32>
    %cst_74 = arith.constant dense<0.000000e+00> : vector<8x64xf32>
    %111 = tpu.matmul %108, %110, %cst_74 {dimension_numbers = #tpu.dot_dimension_numbers<[1], [0], [0], [1], [0, 0, 1, 1], [], []>} : vector<8x64xf32>, vector<64x64xf32>, vector<8x64xf32> -> vector<8x64xf32>
    %c3_75 = arith.constant 3 : index
    %c0_76 = arith.constant 0 : index
    %c0_77 = arith.constant 0 : index
    %112 = vector.load %arg8[%c3_75, %c0_76, %c0_77] : memref<4x1x64xf32, #tpu.memory_space<vmem>>, vector<1x1x64xf32>
    %113 = vector.shape_cast %112 : vector<1x1x64xf32> to vector<1x64xf32>
    %114 = vector.broadcast %113 : vector<1x64xf32> to vector<8x64xf32>
    %115 = arith.addf %111, %114 : vector<8x64xf32>
    %cst_78 = arith.constant 0.000000e+00 : f32
    %116 = vector.broadcast %cst_78 : f32 to vector<8x64xf32>
    %117 = arith.maximumf %115, %116 : vector<8x64xf32>
    %c3_79 = arith.constant 3 : index
    %c0_80 = arith.constant 0 : index
    %c0_81 = arith.constant 0 : index
    %118 = vector.load %arg9[%c3_79, %c0_80, %c0_81] : memref<4x1x64xf32, #tpu.memory_space<vmem>>, vector<1x1x64xf32>
    %119 = vector.shape_cast %118 : vector<1x1x64xf32> to vector<1x64xf32>
    %120 = vector.broadcast %119 : vector<1x64xf32> to vector<8x64xf32>
    %121 = arith.mulf %117, %120 : vector<8x64xf32>
    %cst_82 = arith.constant dense<0.000000e+00> : vector<8xf32>
    %122 = vector.multi_reduction <add>, %121, %cst_82 [1] : vector<8x64xf32> to vector<8xf32>
    %123 = vector.shape_cast %122 : vector<8xf32> to vector<8x1xf32>
    %c3_i32 = arith.constant 3 : i32
    %124 = arith.addi %8, %c3_i32 : i32
    %125 = arith.index_cast %124 : i32 to index
    %126 = memref.load %arg10[%125] : memref<4xf32, #tpu.memory_space<smem>>
    %127 = vector.broadcast %126 : f32 to vector<8x1xf32>
    %128 = arith.addf %123, %127 : vector<8x1xf32>
    %129 = tpu.concatenate %38, %68, %98, %128 in 1 : vector<8x1xf32>, vector<8x1xf32>, vector<8x1xf32>, vector<8x1xf32> -> vector<8x4xf32>
    %c0_83 = arith.constant 0 : index
    %c0_84 = arith.constant 0 : index
    %c0_85 = arith.constant 0 : index
    %130 = vector.load %arg11[%c0_83, %c0_84, %c0_85] : memref<1x8x4xf32, #tpu.memory_space<vmem>>, vector<1x8x4xf32>
    %131 = vector.shape_cast %130 : vector<1x8x4xf32> to vector<8x4xf32>
    %132 = vector.shape_cast %129 : vector<8x4xf32> to vector<1x8x4xf32>
    tpu.vector_store %arg11[%c0_83, %c0_84, %c0_85], %132 {strides = array<i32>} : memref<1x8x4xf32, #tpu.memory_space<vmem>>, vector<1x8x4xf32>,
    return
  }
  func.func @transform_0(%arg0: i32, %arg1: i32) -> (i32, i32) {
    %c0_i32 = arith.constant 0 : i32
    %c0_i32_0 = arith.constant 0 : i32
    return %arg1, %c0_i32 : i32, i32
  }
  func.func @transform_1(%arg0: i32, %arg1: i32) -> (i32, i32) {
    %c0_i32 = arith.constant 0 : i32
    %c0_i32_0 = arith.constant 0 : i32
    return %c0_i32, %arg0 : i32, i32
  }
  func.func @transform_2(%arg0: i32, %arg1: i32) -> (i32, i32) {
    %c0_i32 = arith.constant 0 : i32
    %c0_i32_0 = arith.constant 0 : i32
    return %c0_i32, %arg0 : i32, i32
  }
  func.func @transform_3(%arg0: i32, %arg1: i32) -> (i32, i32, i32) {
    %c0_i32 = arith.constant 0 : i32
    %c0_i32_0 = arith.constant 0 : i32
    %c0_i32_1 = arith.constant 0 : i32
    return %arg0, %c0_i32, %c0_i32_0 : i32, i32, i32
  }
  func.func @transform_4(%arg0: i32, %arg1: i32) -> (i32, i32, i32) {
    %c0_i32 = arith.constant 0 : i32
    %c0_i32_0 = arith.constant 0 : i32
    %c0_i32_1 = arith.constant 0 : i32
    return %arg0, %c0_i32, %c0_i32_0 : i32, i32, i32
  }
  func.func @transform_5(%arg0: i32, %arg1: i32) -> (i32, i32, i32) {
    %c0_i32 = arith.constant 0 : i32
    %c0_i32_0 = arith.constant 0 : i32
    %c0_i32_1 = arith.constant 0 : i32
    return %arg0, %c0_i32, %c0_i32_0 : i32, i32, i32
  }
  func.func @transform_6(%arg0: i32, %arg1: i32) -> (i32, i32, i32) {
    %c0_i32 = arith.constant 0 : i32
    %c0_i32_0 = arith.constant 0 : i32
    %c0_i32_1 = arith.constant 0 : i32
    return %arg0, %c0_i32, %c0_i32_0 : i32, i32, i32
  }
  func.func @transform_7(%arg0: i32, %arg1: i32) -> (i32, i32, i32) {
    %c0_i32 = arith.constant 0 : i32
    %c0_i32_0 = arith.constant 0 : i32
    %c0_i32_1 = arith.constant 0 : i32
    return %arg0, %c0_i32, %c0_i32_0 : i32, i32, i32
  }
  func.func @transform_8(%arg0: i32, %arg1: i32) -> i32 {
    %c0_i32 = arith.constant 0 : i32
    %c0_i32_0 = arith.constant 0 : i32
    return %c0_i32 : i32
  }
  func.func @transform_9(%arg0: i32, %arg1: i32) -> (i32, i32, i32) {
    %c0_i32 = arith.constant 0 : i32
    %c0_i32_0 = arith.constant 0 : i32
    return %arg0, %arg1, %c0_i32 : i32, i32, i32
  }
}

</mosaic_0001>

<llo_original>
// kernel: vectorized_critic_forward.1
$region0: #{vectorized_critic_forward.1}
  #allocation0 [shape = 'u32[]', space=smem, size = 0x4, offset = 0x4, fixed_abs, tag = 'smem constant byte address 0x4 - core index']
  #allocation1 [shape = 'u32[144,128]{1,0:T(1,128)}', space=vmem, size = 0x12000, scoped, tag = 'internal scratch']
  %s0 = inlined_call_operand.vmem [shape: f32[8,12], index: 0, kind: input, shape index: {}]
  %s1 = inlined_call_operand.hbm [shape: f32[12,512], index: 1, kind: input, shape index: {}]
  %s2 = inlined_call_operand.vmem [shape: f32[1,512], index: 2, kind: input, shape index: {}]
  %s3 = inlined_call_operand.hbm [shape: f32[4,64,64], index: 3, kind: input, shape index: {}]
  %s4 = inlined_call_operand.vmem [shape: f32[4,1,64], index: 4, kind: input, shape index: {}]
  %s5 = inlined_call_operand.hbm [shape: f32[4,64,64], index: 5, kind: input, shape index: {}]
  %s6 = inlined_call_operand.vmem [shape: f32[4,1,64], index: 6, kind: input, shape index: {}]
  %s7 = inlined_call_operand.vmem [shape: f32[4,1,64], index: 7, kind: input, shape index: {}]
  %s8 = inlined_call_operand.vmem [shape: f32[4], index: 8, kind: input, shape index: {}]
  %s9 = inlined_call_operand.vmem [shape: f32[1,8,4], index: 9, kind: output, shape index: {}]
  %s10 = sld [smem:[#allocation0]]
  $region62: #{vectorized_critic_forward.1} parent=0
    _
  %s12 = ssub.s32 1, %s10
  %s13 = scalar_select 0, %s12, %s10
  $region1: #{vectorized_critic_forward.1} parent=0
    #allocation2 [shape = 'u8[32768]{0}', space=vmem, size = 0x8000, scoped, tag = 'input window, operand 1, single buffered']
    #allocation3 [shape = 's32[1]{0}', space=sflag, size = 0x4, scoped, tag = 'scoped memory for vectorized_critic_forward.1']
    #allocation4 [shape = 's32[1]{0}', space=sflag, size = 0x4, scoped, tag = 'scoped memory for vectorized_critic_forward.1']
    #allocation5 [shape = 'u8[131072]{0}', space=vmem, size = 0x20000, scoped, tag = 'input window, operand 3, single buffered']
    #allocation6 [shape = 's32[1]{0}', space=sflag, size = 0x4, scoped, tag = 'scoped memory for vectorized_critic_forward.1']
    #allocation7 [shape = 'u8[131072]{0}', space=vmem, size = 0x20000, scoped, tag = 'input window, operand 5, single buffered']
    #allocation8 [shape = 'u8[512]{0}', space=smem, size = 0x200, scoped, tag = 'input window, operand 8, single buffered']
    %14 = vsyncpa [#allocation3], 0
    %15 = vsyncpa [#allocation6], 0
    %16 = vsyncpa [#allocation4], 0
    // Predicated region
    $region2: #{vectorized_critic_forward.1} parent=1 // pred_check
      _
    $region3: #{vectorized_critic_forward.1} parent=1 // pred_check_branch
      %18 = sbr.rel (0) target = $region5
    $region4: #{vectorized_critic_forward.1} parent=1 // pred_region
      _
    $region5: #{vectorized_critic_forward.1} parent=1 // pred_fallthru
      _
    // Predicated region
    $region6: #{vectorized_critic_forward.1} parent=1 // pred_check
      _
    $region7: #{vectorized_critic_forward.1} parent=1 // pred_check_branch
      %20 = sbr.rel (0) target = $region9
    $region8: #{vectorized_critic_forward.1} parent=1 // pred_region
      %s22 = ssub.s32 1024, 1024
      %23 = vsyncadd [#allocation3], %s22
      %s24 = sshll.u32 [#allocation2], 4
      %s25 = int_to_ptr.vmem [resolvable:$true] %s24
      %30 = dma.hbm_to_vmem [thread:$0]  %s1, 1024, %s25, [#allocation3], 512, 512, 32
    $region9: #{vectorized_critic_forward.1} parent=1 // pred_fallthru
      _
    // Predicated region
    $region10: #{vectorized_critic_forward.1} parent=1 // pred_check
      _
    $region11: #{vectorized_critic_forward.1} parent=1 // pred_check_branch
      %32 = sbr.rel (0) target = $region13
    $region12: #{vectorized_critic_forward.1} parent=1 // pred_region
      _
    $region13: #{vectorized_critic_forward.1} parent=1 // pred_fallthru
      _
    // Predicated region
    $region14: #{vectorized_critic_forward.1} parent=1 // pred_check
      _
    $region15: #{vectorized_critic_forward.1} parent=1 // pred_check_branch
      %34 = sbr.rel (0) target = $region17
    $region16: #{vectorized_critic_forward.1} parent=1 // pred_region
      %s36 = ssub.s32 4096, 4096
      %37 = vsyncadd [#allocation6], %s36
      %s38 = sshll.u32 [#allocation5], 4
      %s39 = int_to_ptr.vmem [resolvable:$true] %s38
      %44 = dma.hbm_to_vmem [thread:$0]  %s3, 4096, %s39, [#allocation6], 128, 128, 8
    $region17: #{vectorized_critic_forward.1} parent=1 // pred_fallthru
      _
    // Predicated region
    $region18: #{vectorized_critic_forward.1} parent=1 // pred_check
      _
    $region19: #{vectorized_critic_forward.1} parent=1 // pred_check_branch
      %46 = sbr.rel (0) target = $region21
    $region20: #{vectorized_critic_forward.1} parent=1 // pred_region
      _
    $region21: #{vectorized_critic_forward.1} parent=1 // pred_fallthru
      _
    // Predicated region
    $region22: #{vectorized_critic_forward.1} parent=1 // pred_check
      _
    $region23: #{vectorized_critic_forward.1} parent=1 // pred_check_branch
      %48 = sbr.rel (0) target = $region25
    $region24: #{vectorized_critic_forward.1} parent=1 // pred_region
      %s50 = ssub.s32 4096, 4096
      %51 = vsyncadd [#allocation6], %s50
      %s52 = sshll.u32 [#allocation7], 4
      %s53 = int_to_ptr.vmem [resolvable:$true] %s52
      %58 = dma.hbm_to_vmem [thread:$0]  %s5, 4096, %s53, [#allocation6], 128, 128, 8
    $region25: #{vectorized_critic_forward.1} parent=1 // pred_fallthru
      _
    // Predicated region
    $region26: #{vectorized_critic_forward.1} parent=1 // pred_check
      _
    $region27: #{vectorized_critic_forward.1} parent=1 // pred_check_branch
      %60 = sbr.rel (0) target = $region29
    $region28: #{vectorized_critic_forward.1} parent=1 // pred_region
      _
    $region29: #{vectorized_critic_forward.1} parent=1 // pred_fallthru
      _
    // Predicated region
    $region30: #{vectorized_critic_forward.1} parent=1 // pred_check
      _
    $region31: #{vectorized_critic_forward.1} parent=1 // pred_check_branch
      %62 = sbr.rel (0) target = $region33
    $region32: #{vectorized_critic_forward.1} parent=1 // pred_region
      _
    $region33: #{vectorized_critic_forward.1} parent=1 // pred_fallthru
      _
    // Predicated region
    $region34: #{vectorized_critic_forward.1} parent=1 // pred_check
      _
    $region35: #{vectorized_critic_forward.1} parent=1 // pred_check_branch
      %64 = sbr.rel (0) target = $region37
    $region36: #{vectorized_critic_forward.1} parent=1 // pred_region
      %s66 = ssub.s32 16, 16
      %67 = vsyncadd [#allocation4], %s66
      %s69 = sshll.u32 %s8, 4
      %s70 = int_to_ptr.vmem [resolvable:$true] %s69
      %72 = dma.vmem_to_smem %s70, 16, [#allocation8], [#allocation4]
    $region37: #{vectorized_critic_forward.1} parent=1 // pred_fallthru
      _
    // Predicated region
    $region38: #{vectorized_critic_forward.1} parent=1 // pred_check
      _
    $region39: #{vectorized_critic_forward.1} parent=1 // pred_check_branch
      %74 = sbr.rel (0) target = $region41
    $region40: #{vectorized_critic_forward.1} parent=1 // pred_region
      %75 = dma.done [#allocation3], 1024
    $region41: #{vectorized_critic_forward.1} parent=1 // pred_fallthru
      _
    // Predicated region
    $region42: #{vectorized_critic_forward.1} parent=1 // pred_check
      _
    $region43: #{vectorized_critic_forward.1} parent=1 // pred_check_branch
      %77 = sbr.rel (0) target = $region45
    $region44: #{vectorized_critic_forward.1} parent=1 // pred_region
      %78 = dma.done [#allocation6], 4096
    $region45: #{vectorized_critic_forward.1} parent=1 // pred_fallthru
      _
    // Predicated region
    $region46: #{vectorized_critic_forward.1} parent=1 // pred_check
      _
    $region47: #{vectorized_critic_forward.1} parent=1 // pred_check_branch
      %80 = sbr.rel (0) target = $region49
    $region48: #{vectorized_critic_forward.1} parent=1 // pred_region
      %81 = dma.done [#allocation6], 4096
    $region49: #{vectorized_critic_forward.1} parent=1 // pred_fallthru
      _
    // Predicated region
    $region50: #{vectorized_critic_forward.1} parent=1 // pred_check
      _
    $region51: #{vectorized_critic_forward.1} parent=1 // pred_check_branch
      %83 = sbr.rel (0) target = $region53
    $region52: #{vectorized_critic_forward.1} parent=1 // pred_region
      %84 = dma.done [#allocation4], 16
    $region53: #{vectorized_critic_forward.1} parent=1 // pred_fallthru
      _
    %85 = sfence
    %v86 = vld [vmem:[%s0] sm:$0xff]
    %v87 = vld [vmem:[#allocation2] sm:$0xff]
    %v88 = vld [vmem:[#allocation2 + $0x8] sm:$0xff]
    %v89 = vld [vmem:[#allocation2 + $0x10] sm:$0xff]
    %v90 = vld [vmem:[#allocation2 + $0x18] sm:$0xff]
    %v91 = vld [vmem:[#allocation2 + $0x20] sm:$0xf]
    %v92 = vld [vmem:[#allocation2 + $0x28] sm:$0xf]
    %v93 = vld [vmem:[#allocation2 + $0x30] sm:$0xf]
    %v94 = vld [vmem:[#allocation2 + $0x38] sm:$0xf]
    %v95 = vld [vmem:[%s2] sm:$0xf]
    %v97 = vlaneseq
    %v98 = vshrl.u32 %v97, 7
    %v99 = vsub.s32 0, %v98
    %v100 = vrot.slane %v95, %v99
    %v101 = vlaneseq
    %v102 = vshrl.u32 %v101, 7
    %v103 = vsub.s32 1, %v102
    %v104 = vrot.slane %v95, %v103
    %v105 = vlaneseq
    %v106 = vshrl.u32 %v105, 7
    %v107 = vsub.s32 2, %v106
    %v108 = vrot.slane %v95, %v107
    %v109 = vlaneseq
    %v110 = vshrl.u32 %v109, 7
    %v111 = vsub.s32 3, %v110
    %v112 = vrot.slane %v95, %v111
    %vm117 = vcmask 97280
    %v119 = vsel %vm117, %v86, 0
    %vm121 = vcmask 1043456
    %v123 = vsel %vm121, %v91, 0
    %v126 = vsel %vm121, %v92, 0
    %v129 = vsel %vm121, %v93, 0
    %v132 = vsel %vm121, %v94, 0
    %134 = vmatprep.subr.mxu0 %v88
    %135 = vmatpush1.msra.mxu0 %v87
    %136 = vmatprep.subr.mxu0 %v126
    %137 = vmatpush1.msra.mxu0 %v123
    %138 = vmatprep.subr.mxu0 0.0
    %139 = vmatpush1.msra.mxu0 0.0
    %140 = vmatprep.subr.mxu0 0.0
    %141 = vmatpush1.msra.mxu0 0.0
    %142 = vmatprep.subr.mxu0 0.0
    %143 = vmatpush1.msra.mxu0 0.0
    %144 = vmatprep.subr.mxu0 0.0
    %145 = vmatpush1.msra.mxu0 0.0
    %146 = vmatprep.subr.mxu0 0.0
    %147 = vmatpush1.msra.mxu0 0.0
    %148 = vmatprep.subr.mxu0 0.0
    %149 = vmatpush1.msra.mxu0 0.0
    %150 = vmatprep.subr.mxu0 0.0
    %151 = vmatpush1.msra.mxu0 0.0
    %152 = vmatprep.subr.mxu0 0.0
    %153 = vmatpush1.msra.mxu0 0.0
    %154 = vmatprep.subr.mxu0 0.0
    %155 = vmatpush1.msra.mxu0 0.0
    %156 = vmatprep.subr.mxu0 0.0
    %157 = vmatpush1.msra.mxu0 0.0
    %158 = vmatprep.subr.mxu0 0.0
    %159 = vmatpush1.msra.mxu0 0.0
    %160 = vmatprep.subr.mxu0 0.0
    %161 = vmatpush1.msra.mxu0 0.0
    %162 = vmatprep.subr.mxu0 0.0
    %163 = vmatpush1.msra.mxu0 0.0
    %164 = vmatprep.subr.mxu0 0.0
    %165 = vmatpush1.msra.mxu0 0.0
    %166 = vmatprep.subr.mxu0 0.0
    %167 = vmatpush1.msra.mxu0 0.0
    %168 = vmatprep.subr.mxu0 0.0
    %169 = vmatpush1.msra.mxu0 0.0
    %170 = vmatprep.subr.mxu0 0.0
    %171 = vmatpush1.msra.mxu0 0.0
    %172 = vmatprep.subr.mxu0 0.0
    %173 = vmatpush1.msra.mxu0 0.0
    %174 = vmatprep.subr.mxu0 0.0
    %175 = vmatpush1.msra.mxu0 0.0
    %176 = vmatprep.subr.mxu0 0.0
    %177 = vmatpush1.msra.mxu0 0.0
    %178 = vmatprep.subr.mxu0 0.0
    %179 = vmatpush1.msra.mxu0 0.0
    %180 = vmatprep.subr.mxu0 0.0
    %181 = vmatpush1.msra.mxu0 0.0
    %182 = vmatprep.subr.mxu0 0.0
    %183 = vmatpush1.msra.mxu0 0.0
    %184 = vmatprep.subr.mxu0 0.0
    %185 = vmatpush1.msra.mxu0 0.0
    %186 = vmatprep.subr.mxu0 0.0
    %187 = vmatpush1.msra.mxu0 0.0
    %188 = vmatprep.subr.mxu0 0.0
    %189 = vmatpush1.msra.mxu0 0.0
    %190 = vmatprep.subr.mxu0 0.0
    %191 = vmatpush1.msra.mxu0 0.0
    %192 = vmatprep.subr.mxu0 0.0
    %193 = vmatpush1.msra.mxu0 0.0
    %194 = vmatprep.subr.mxu0 0.0
    %195 = vmatpush1.msra.mxu0 0.0
    %196 = vmatprep.subr.mxu0 0.0
    %197 = vmatpush1.msra.mxu0 0.0
    %198 = vmatprep.mubr.f32.mxu0 0.0
    %199 = vmatmul.mubr.f32.gmra.mrb[0].mxu0 %v119
    %v200 = vpop.f32.mrb[0].mxu0
    %v201 = vadd.f32 %v100, %v200
    %v202 = vpop.f32.mrb[0].mxu0
    %v203 = vadd.f32 %v104, %v202
    %204 = vdwg.mxu0
    %205 = vmatprep.subr.mxu0 %v90
    %206 = vmatpush1.msra.mxu0 %v89
    %207 = vmatprep.subr.mxu0 %v132
    %208 = vmatpush1.msra.mxu0 %v129
    %209 = vmatprep.subr.mxu0 0.0
    %210 = vmatpush1.msra.mxu0 0.0
    %211 = vmatprep.subr.mxu0 0.0
    %212 = vmatpush1.msra.mxu0 0.0
    %213 = vmatprep.subr.mxu0 0.0
    %214 = vmatpush1.msra.mxu0 0.0
    %215 = vmatprep.subr.mxu0 0.0
    %216 = vmatpush1.msra.mxu0 0.0
    %217 = vmatprep.subr.mxu0 0.0
    %218 = vmatpush1.msra.mxu0 0.0
    %219 = vmatprep.subr.mxu0 0.0
    %220 = vmatpush1.msra.mxu0 0.0
    %221 = vmatprep.subr.mxu0 0.0
    %222 = vmatpush1.msra.mxu0 0.0
    %223 = vmatprep.subr.mxu0 0.0
    %224 = vmatpush1.msra.mxu0 0.0
    %225 = vmatprep.subr.mxu0 0.0
    %226 = vmatpush1.msra.mxu0 0.0
    %227 = vmatprep.subr.mxu0 0.0
    %228 = vmatpush1.msra.mxu0 0.0
    %229 = vmatprep.subr.mxu0 0.0
    %230 = vmatpush1.msra.mxu0 0.0
    %231 = vmatprep.subr.mxu0 0.0
    %232 = vmatpush1.msra.mxu0 0.0
    %233 = vmatprep.subr.mxu0 0.0
    %234 = vmatpush1.msra.mxu0 0.0
    %235 = vmatprep.subr.mxu0 0.0
    %236 = vmatpush1.msra.mxu0 0.0
    %237 = vmatprep.subr.mxu0 0.0
    %238 = vmatpush1.msra.mxu0 0.0
    %239 = vmatprep.subr.mxu0 0.0
    %240 = vmatpush1.msra.mxu0 0.0
    %241 = vmatprep.subr.mxu0 0.0
    %242 = vmatpush1.msra.mxu0 0.0
    %243 = vmatprep.subr.mxu0 0.0
    %244 = vmatpush1.msra.mxu0 0.0
    %245 = vmatprep.subr.mxu0 0.0
    %246 = vmatpush1.msra.mxu0 0.0
    %247 = vmatprep.subr.mxu0 0.0
    %248 = vmatpush1.msra.mxu0 0.0
    %249 = vmatprep.subr.mxu0 0.0
    %250 = vmatpush1.msra.mxu0 0.0
    %251 = vmatprep.subr.mxu0 0.0
    %252 = vmatpush1.msra.mxu0 0.0
    %253 = vmatprep.subr.mxu0 0.0
    %254 = vmatpush1.msra.mxu0 0.0
    %255 = vmatprep.subr.mxu0 0.0
    %256 = vmatpush1.msra.mxu0 0.0
    %257 = vmatprep.subr.mxu0 0.0
    %258 = vmatpush1.msra.mxu0 0.0
    %259 = vmatprep.subr.mxu0 0.0
    %260 = vmatpush1.msra.mxu0 0.0
    %261 = vmatprep.subr.mxu0 0.0
    %262 = vmatpush1.msra.mxu0 0.0
    %263 = vmatprep.subr.mxu0 0.0
    %264 = vmatpush1.msra.mxu0 0.0
    %265 = vmatprep.subr.mxu0 0.0
    %266 = vmatpush1.msra.mxu0 0.0
    %267 = vmatprep.subr.mxu0 0.0
    %268 = vmatpush1.msra.mxu0 0.0
    %269 = vmatprep.mubr.f32.mxu0 0.0
    %270 = vmatmul.mubr.f32.gmra.mrb[0].mxu0 %v119
    %v271 = vpop.f32.mrb[0].mxu0
    %v272 = vadd.f32 %v108, %v271
    %v273 = vpop.f32.mrb[0].mxu0
    %v274 = vadd.f32 %v112, %v273
    %275 = vdwg.mxu0
    %v276 = vmax.f32 %v201, 0.0
    %v277 = vmax.f32 %v203, 0.0
    %v278 = vmax.f32 %v272, 0.0
    %v279 = vmax.f32 %v274, 0.0
    %s280 = smul.u32 0, 4
    %v281 = vld [vmem:[#allocation5] sm:$0xff]
    %v282 = vld [vmem:[#allocation5 + $0x8] sm:$0xff]
    %v283 = vld [vmem:[#allocation5 + $0x10] sm:$0xff]
    %v284 = vld [vmem:[#allocation5 + $0x18] sm:$0xff]
    %v285 = vld [vmem:[#allocation5 + $0x20] sm:$0xff]
    %v286 = vld [vmem:[#allocation5 + $0x28] sm:$0xff]
    %v287 = vld [vmem:[#allocation5 + $0x30] sm:$0xff]
    %v288 = vld [vmem:[#allocation5 + $0x38] sm:$0xff]
    %v289 = vld [vmem:[%s4] sm:$0x1]
    %v291 = vlaneseq
    %v292 = vshrl.u32 %v291, 7
    %v293 = vsub.s32 0, %v292
    %v294 = vrot.slane %v289, %v293
    %vm296 = vcmask 523264
    %v298 = vsel %vm296, %v276, 0
    %300 = vmatprep.subr.mxu0 0.0
    %301 = vmatpush1.msra.mxu0 %v281
    %302 = vmatprep.subr.mxu0 0.0
    %303 = vmatpush1.msra.mxu0 %v282
    %304 = vmatprep.subr.mxu0 0.0
    %305 = vmatpush1.msra.mxu0 %v283
    %306 = vmatprep.subr.mxu0 0.0
    %307 = vmatpush1.msra.mxu0 %v284
    %308 = vmatprep.subr.mxu0 0.0
    %309 = vmatpush1.msra.mxu0 %v285
    %310 = vmatprep.subr.mxu0 0.0
    %311 = vmatpush1.msra.mxu0 %v286
    %312 = vmatprep.subr.mxu0 0.0
    %313 = vmatpush1.msra.mxu0 %v287
    %314 = vmatprep.subr.mxu0 0.0
    %315 = vmatpush1.msra.mxu0 %v288
    %316 = vmatprep.subr.mxu0 0.0
    %317 = vmatpush1.msra.mxu0 0.0
    %318 = vmatprep.subr.mxu0 0.0
    %319 = vmatpush1.msra.mxu0 0.0
    %320 = vmatprep.subr.mxu0 0.0
    %321 = vmatpush1.msra.mxu0 0.0
    %322 = vmatprep.subr.mxu0 0.0
    %323 = vmatpush1.msra.mxu0 0.0
    %324 = vmatprep.subr.mxu0 0.0
    %325 = vmatpush1.msra.mxu0 0.0
    %326 = vmatprep.subr.mxu0 0.0
    %327 = vmatpush1.msra.mxu0 0.0
    %328 = vmatprep.subr.mxu0 0.0
    %329 = vmatpush1.msra.mxu0 0.0
    %330 = vmatprep.subr.mxu0 0.0
    %331 = vmatpush1.msra.mxu0 0.0
    %332 = vmatprep.subr.mxu0 0.0
    %333 = vmatpush1.msra.mxu0 0.0
    %334 = vmatprep.subr.mxu0 0.0
    %335 = vmatpush1.msra.mxu0 0.0
    %336 = vmatprep.subr.mxu0 0.0
    %337 = vmatpush1.msra.mxu0 0.0
    %338 = vmatprep.subr.mxu0 0.0
    %339 = vmatpush1.msra.mxu0 0.0
    %340 = vmatprep.subr.mxu0 0.0
    %341 = vmatpush1.msra.mxu0 0.0
    %342 = vmatprep.subr.mxu0 0.0
    %343 = vmatpush1.msra.mxu0 0.0
    %344 = vmatprep.subr.mxu0 0.0
    %345 = vmatpush1.msra.mxu0 0.0
    %346 = vmatprep.subr.mxu0 0.0
    %347 = vmatpush1.msra.mxu0 0.0
    %348 = vmatprep.subr.mxu0 0.0
    %349 = vmatpush1.msra.mxu0 0.0
    %350 = vmatprep.subr.mxu0 0.0
    %351 = vmatpush1.msra.mxu0 0.0
    %352 = vmatprep.subr.mxu0 0.0
    %353 = vmatpush1.msra.mxu0 0.0
    %354 = vmatprep.subr.mxu0 0.0
    %355 = vmatpush1.msra.mxu0 0.0
    %356 = vmatprep.subr.mxu0 0.0
    %357 = vmatpush1.msra.mxu0 0.0
    %358 = vmatprep.subr.mxu0 0.0
    %359 = vmatpush1.msra.mxu0 0.0
    %360 = vmatprep.subr.mxu0 0.0
    %361 = vmatpush1.msra.mxu0 0.0
    %362 = vmatprep.subr.mxu0 0.0
    %363 = vmatpush1.msra.mxu0 0.0
    %364 = vmatprep.mubr.f32.mxu0 0.0
    %365 = vmatmul.mubr.f32.gmra.mrb[0].mxu0 %v298
    %v366 = vpop.f32.mrb[0].mxu0
    %v367 = vadd.f32 %v294, %v366
    %v368 = vpop.f32.mrb[0].mxu0
    %369 = vdwg.mxu0
    %v370 = vmax.f32 %v367, 0.0
    %v371 = vld [vmem:[#allocation7] sm:$0xff]
    %v372 = vld [vmem:[#allocation7 + $0x8] sm:$0xff]
    %v373 = vld [vmem:[#allocation7 + $0x10] sm:$0xff]
    %v374 = vld [vmem:[#allocation7 + $0x18] sm:$0xff]
    %v375 = vld [vmem:[#allocation7 + $0x20] sm:$0xff]
    %v376 = vld [vmem:[#allocation7 + $0x28] sm:$0xff]
    %v377 = vld [vmem:[#allocation7 + $0x30] sm:$0xff]
    %v378 = vld [vmem:[#allocation7 + $0x38] sm:$0xff]
    %v379 = vld [vmem:[%s6] sm:$0x1]
    %v381 = vlaneseq
    %v382 = vshrl.u32 %v381, 7
    %v383 = vsub.s32 0, %v382
    %v384 = vrot.slane %v379, %v383
    %v387 = vsel %vm296, %v370, 0
    %389 = vmatprep.subr.mxu0 0.0
    %390 = vmatpush1.msra.mxu0 %v371
    %391 = vmatprep.subr.mxu0 0.0
    %392 = vmatpush1.msra.mxu0 %v372
    %393 = vmatprep.subr.mxu0 0.0
    %394 = vmatpush1.msra.mxu0 %v373
    %395 = vmatprep.subr.mxu0 0.0
    %396 = vmatpush1.msra.mxu0 %v374
    %397 = vmatprep.subr.mxu0 0.0
    %398 = vmatpush1.msra.mxu0 %v375
    %399 = vmatprep.subr.mxu0 0.0
    %400 = vmatpush1.msra.mxu0 %v376
    %401 = vmatprep.subr.mxu0 0.0
    %402 = vmatpush1.msra.mxu0 %v377
    %403 = vmatprep.subr.mxu0 0.0
    %404 = vmatpush1.msra.mxu0 %v378
    %405 = vmatprep.subr.mxu0 0.0
    %406 = vmatpush1.msra.mxu0 0.0
    %407 = vmatprep.subr.mxu0 0.0
    %408 = vmatpush1.msra.mxu0 0.0
    %409 = vmatprep.subr.mxu0 0.0
    %410 = vmatpush1.msra.mxu0 0.0
    %411 = vmatprep.subr.mxu0 0.0
    %412 = vmatpush1.msra.mxu0 0.0
    %413 = vmatprep.subr.mxu0 0.0
    %414 = vmatpush1.msra.mxu0 0.0
    %415 = vmatprep.subr.mxu0 0.0
    %416 = vmatpush1.msra.mxu0 0.0
    %417 = vmatprep.subr.mxu0 0.0
    %418 = vmatpush1.msra.mxu0 0.0
    %419 = vmatprep.subr.mxu0 0.0
    %420 = vmatpush1.msra.mxu0 0.0
    %421 = vmatprep.subr.mxu0 0.0
    %422 = vmatpush1.msra.mxu0 0.0
    %423 = vmatprep.subr.mxu0 0.0
    %424 = vmatpush1.msra.mxu0 0.0
    %425 = vmatprep.subr.mxu0 0.0
    %426 = vmatpush1.msra.mxu0 0.0
    %427 = vmatprep.subr.mxu0 0.0
    %428 = vmatpush1.msra.mxu0 0.0
    %429 = vmatprep.subr.mxu0 0.0
    %430 = vmatpush1.msra.mxu0 0.0
    %431 = vmatprep.subr.mxu0 0.0
    %432 = vmatpush1.msra.mxu0 0.0
    %433 = vmatprep.subr.mxu0 0.0
    %434 = vmatpush1.msra.mxu0 0.0
    %435 = vmatprep.subr.mxu0 0.0
    %436 = vmatpush1.msra.mxu0 0.0
    %437 = vmatprep.subr.mxu0 0.0
    %438 = vmatpush1.msra.mxu0 0.0
    %439 = vmatprep.subr.mxu0 0.0
    %440 = vmatpush1.msra.mxu0 0.0
    %441 = vmatprep.subr.mxu0 0.0
    %442 = vmatpush1.msra.mxu0 0.0
    %443 = vmatprep.subr.mxu0 0.0
    %444 = vmatpush1.msra.mxu0 0.0
    %445 = vmatprep.subr.mxu0 0.0
    %446 = vmatpush1.msra.mxu0 0.0
    %447 = vmatprep.subr.mxu0 0.0
    %448 = vmatpush1.msra.mxu0 0.0
    %449 = vmatprep.subr.mxu0 0.0
    %450 = vmatpush1.msra.mxu0 0.0
    %451 = vmatprep.subr.mxu0 0.0
    %452 = vmatpush1.msra.mxu0 0.0
    %453 = vmatprep.mubr.f32.mxu0 0.0
    %454 = vmatmul.mubr.f32.gmra.mrb[0].mxu0 %v387
    %v455 = vpop.f32.mrb[0].mxu0
    %v456 = vadd.f32 %v384, %v455
    %v457 = vpop.f32.mrb[0].mxu0
    %458 = vdwg.mxu0
    %v459 = vmax.f32 %v456, 0.0
    %v460 = vld [vmem:[%s7] sm:$0x1]
    %v462 = vlaneseq
    %v463 = vshrl.u32 %v462, 7
    %v464 = vsub.s32 0, %v463
    %v465 = vrot.slane %v460, %v464
    %v467 = vmul.f32 %v459, %v465
    %v468 = vsel %vm296, %v467, 0.0
    %469 = vadd.xlane.f32.xlu0 %v468
    %v470 = vpop.xlane.xlu0 %469
    %s471 = sld [smem:[#allocation8 + %s280]]
    %v472 = vstv %s471
    %v473 = vadd.f32 %v470, %v472
    %s474 = scalar_lea.vmem [#allocation5], 64
    %v475 = vld [vmem:[%s474] sm:$0xff]
    %v476 = vld [vmem:[%s474 + $0x8] sm:$0xff]
    %v477 = vld [vmem:[%s474 + $0x10] sm:$0xff]
    %v478 = vld [vmem:[%s474 + $0x18] sm:$0xff]
    %v479 = vld [vmem:[%s474 + $0x20] sm:$0xff]
    %v480 = vld [vmem:[%s474 + $0x28] sm:$0xff]
    %v481 = vld [vmem:[%s474 + $0x30] sm:$0xff]
    %v482 = vld [vmem:[%s474 + $0x38] sm:$0xff]
    %s483 = scalar_lea.vmem %s4, 1
    %v484 = vld [vmem:[%s483] sm:$0x1]
    %v486 = vlaneseq
    %v487 = vshrl.u32 %v486, 7
    %v488 = vsub.s32 0, %v487
    %v489 = vrot.slane %v484, %v488
    %v492 = vsel %vm296, %v277, 0
    %494 = vmatprep.subr.mxu0 0.0
    %495 = vmatpush1.msra.mxu0 %v475
    %496 = vmatprep.subr.mxu0 0.0
    %497 = vmatpush1.msra.mxu0 %v476
    %498 = vmatprep.subr.mxu0 0.0
    %499 = vmatpush1.msra.mxu0 %v477
    %500 = vmatprep.subr.mxu0 0.0
    %501 = vmatpush1.msra.mxu0 %v478
    %502 = vmatprep.subr.mxu0 0.0
    %503 = vmatpush1.msra.mxu0 %v479
    %504 = vmatprep.subr.mxu0 0.0
    %505 = vmatpush1.msra.mxu0 %v480
    %506 = vmatprep.subr.mxu0 0.0
    %507 = vmatpush1.msra.mxu0 %v481
    %508 = vmatprep.subr.mxu0 0.0
    %509 = vmatpush1.msra.mxu0 %v482
    %510 = vmatprep.subr.mxu0 0.0
    %511 = vmatpush1.msra.mxu0 0.0
    %512 = vmatprep.subr.mxu0 0.0
    %513 = vmatpush1.msra.mxu0 0.0
    %514 = vmatprep.subr.mxu0 0.0
    %515 = vmatpush1.msra.mxu0 0.0
    %516 = vmatprep.subr.mxu0 0.0
    %517 = vmatpush1.msra.mxu0 0.0
    %518 = vmatprep.subr.mxu0 0.0
    %519 = vmatpush1.msra.mxu0 0.0
    %520 = vmatprep.subr.mxu0 0.0
    %521 = vmatpush1.msra.mxu0 0.0
    %522 = vmatprep.subr.mxu0 0.0
    %523 = vmatpush1.msra.mxu0 0.0
    %524 = vmatprep.subr.mxu0 0.0
    %525 = vmatpush1.msra.mxu0 0.0
    %526 = vmatprep.subr.mxu0 0.0
    %527 = vmatpush1.msra.mxu0 0.0
    %528 = vmatprep.subr.mxu0 0.0
    %529 = vmatpush1.msra.mxu0 0.0
    %530 = vmatprep.subr.mxu0 0.0
    %531 = vmatpush1.msra.mxu0 0.0
    %532 = vmatprep.subr.mxu0 0.0
    %533 = vmatpush1.msra.mxu0 0.0
    %534 = vmatprep.subr.mxu0 0.0
    %535 = vmatpush1.msra.mxu0 0.0
    %536 = vmatprep.subr.mxu0 0.0
    %537 = vmatpush1.msra.mxu0 0.0
    %538 = vmatprep.subr.mxu0 0.0
    %539 = vmatpush1.msra.mxu0 0.0
    %540 = vmatprep.subr.mxu0 0.0
    %541 = vmatpush1.msra.mxu0 0.0
    %542 = vmatprep.subr.mxu0 0.0
    %543 = vmatpush1.msra.mxu0 0.0
    %544 = vmatprep.subr.mxu0 0.0
    %545 = vmatpush1.msra.mxu0 0.0
    %546 = vmatprep.subr.mxu0 0.0
    %547 = vmatpush1.msra.mxu0 0.0
    %548 = vmatprep.subr.mxu0 0.0
    %549 = vmatpush1.msra.mxu0 0.0
    %550 = vmatprep.subr.mxu0 0.0
    %551 = vmatpush1.msra.mxu0 0.0
    %552 = vmatprep.subr.mxu0 0.0
    %553 = vmatpush1.msra.mxu0 0.0
    %554 = vmatprep.subr.mxu0 0.0
    %555 = vmatpush1.msra.mxu0 0.0
    %556 = vmatprep.subr.mxu0 0.0
    %557 = vmatpush1.msra.mxu0 0.0
    %558 = vmatprep.mubr.f32.mxu0 0.0
    %559 = vmatmul.mubr.f32.gmra.mrb[0].mxu0 %v492
    %v560 = vpop.f32.mrb[0].mxu0
    %v561 = vadd.f32 %v489, %v560
    %v562 = vpop.f32.mrb[0].mxu0
    %563 = vdwg.mxu0
    %v564 = vmax.f32 %v561, 0.0
    %s565 = scalar_lea.vmem [#allocation7], 64
    %v566 = vld [vmem:[%s565] sm:$0xff]
    %v567 = vld [vmem:[%s565 + $0x8] sm:$0xff]
    %v568 = vld [vmem:[%s565 + $0x10] sm:$0xff]
    %v569 = vld [vmem:[%s565 + $0x18] sm:$0xff]
    %v570 = vld [vmem:[%s565 + $0x20] sm:$0xff]
    %v571 = vld [vmem:[%s565 + $0x28] sm:$0xff]
    %v572 = vld [vmem:[%s565 + $0x30] sm:$0xff]
    %v573 = vld [vmem:[%s565 + $0x38] sm:$0xff]
    %s574 = scalar_lea.vmem %s6, 1
    %v575 = vld [vmem:[%s574] sm:$0x1]
    %v577 = vlaneseq
    %v578 = vshrl.u32 %v577, 7
    %v579 = vsub.s32 0, %v578
    %v580 = vrot.slane %v575, %v579
    %v583 = vsel %vm296, %v564, 0
    %585 = vmatprep.subr.mxu0 0.0
    %586 = vmatpush1.msra.mxu0 %v566
    %587 = vmatprep.subr.mxu0 0.0
    %588 = vmatpush1.msra.mxu0 %v567
    %589 = vmatprep.subr.mxu0 0.0
    %590 = vmatpush1.msra.mxu0 %v568
    %591 = vmatprep.subr.mxu0 0.0
    %592 = vmatpush1.msra.mxu0 %v569
    %593 = vmatprep.subr.mxu0 0.0
    %594 = vmatpush1.msra.mxu0 %v570
    %595 = vmatprep.subr.mxu0 0.0
    %596 = vmatpush1.msra.mxu0 %v571
    %597 = vmatprep.subr.mxu0 0.0
    %598 = vmatpush1.msra.mxu0 %v572
    %599 = vmatprep.subr.mxu0 0.0
    %600 = vmatpush1.msra.mxu0 %v573
    %601 = vmatprep.subr.mxu0 0.0
    %602 = vmatpush1.msra.mxu0 0.0
    %603 = vmatprep.subr.mxu0 0.0
    %604 = vmatpush1.msra.mxu0 0.0
    %605 = vmatprep.subr.mxu0 0.0
    %606 = vmatpush1.msra.mxu0 0.0
    %607 = vmatprep.subr.mxu0 0.0
    %608 = vmatpush1.msra.mxu0 0.0
    %609 = vmatprep.subr.mxu0 0.0
    %610 = vmatpush1.msra.mxu0 0.0
    %611 = vmatprep.subr.mxu0 0.0
    %612 = vmatpush1.msra.mxu0 0.0
    %613 = vmatprep.subr.mxu0 0.0
    %614 = vmatpush1.msra.mxu0 0.0
    %615 = vmatprep.subr.mxu0 0.0
    %616 = vmatpush1.msra.mxu0 0.0
    %617 = vmatprep.subr.mxu0 0.0
    %618 = vmatpush1.msra.mxu0 0.0
    %619 = vmatprep.subr.mxu0 0.0
    %620 = vmatpush1.msra.mxu0 0.0
    %621 = vmatprep.subr.mxu0 0.0
    %622 = vmatpush1.msra.mxu0 0.0
    %623 = vmatprep.subr.mxu0 0.0
    %624 = vmatpush1.msra.mxu0 0.0
    %625 = vmatprep.subr.mxu0 0.0
    %626 = vmatpush1.msra.mxu0 0.0
    %627 = vmatprep.subr.mxu0 0.0
    %628 = vmatpush1.msra.mxu0 0.0
    %629 = vmatprep.subr.mxu0 0.0
    %630 = vmatpush1.msra.mxu0 0.0
    %631 = vmatprep.subr.mxu0 0.0
    %632 = vmatpush1.msra.mxu0 0.0
    %633 = vmatprep.subr.mxu0 0.0
    %634 = vmatpush1.msra.mxu0 0.0
    %635 = vmatprep.subr.mxu0 0.0
    %636 = vmatpush1.msra.mxu0 0.0
    %637 = vmatprep.subr.mxu0 0.0
    %638 = vmatpush1.msra.mxu0 0.0
    %639 = vmatprep.subr.mxu0 0.0
    %640 = vmatpush1.msra.mxu0 0.0
    %641 = vmatprep.subr.mxu0 0.0
    %642 = vmatpush1.msra.mxu0 0.0
    %643 = vmatprep.subr.mxu0 0.0
    %644 = vmatpush1.msra.mxu0 0.0
    %645 = vmatprep.subr.mxu0 0.0
    %646 = vmatpush1.msra.mxu0 0.0
    %647 = vmatprep.subr.mxu0 0.0
    %648 = vmatpush1.msra.mxu0 0.0
    %649 = vmatprep.mubr.f32.mxu0 0.0
    %650 = vmatmul.mubr.f32.gmra.mrb[0].mxu0 %v583
    %v651 = vpop.f32.mrb[0].mxu0
    %v652 = vadd.f32 %v580, %v651
    %v653 = vpop.f32.mrb[0].mxu0
    %654 = vdwg.mxu0
    %v655 = vmax.f32 %v652, 0.0
    %s656 = scalar_lea.vmem %s7, 1
    %v657 = vld [vmem:[%s656] sm:$0x1]
    %v659 = vlaneseq
    %v660 = vshrl.u32 %v659, 7
    %v661 = vsub.s32 0, %v660
    %v662 = vrot.slane %v657, %v661
    %v664 = vmul.f32 %v655, %v662
    %v665 = vsel %vm296, %v664, 0.0
    %666 = vadd.xlane.f32.xlu0 %v665
    %v667 = vpop.xlane.xlu0 %666
    %s668 = sadd.s32 %s280, 1
    %s669 = sld [smem:[#allocation8 + %s668]]
    %v670 = vstv %s669
    %v671 = vadd.f32 %v667, %v670
    %s672 = scalar_lea.vmem [#allocation5], 128
    %v673 = vld [vmem:[%s672] sm:$0xff]
    %v674 = vld [vmem:[%s672 + $0x8] sm:$0xff]
    %v675 = vld [vmem:[%s672 + $0x10] sm:$0xff]
    %v676 = vld [vmem:[%s672 + $0x18] sm:$0xff]
    %v677 = vld [vmem:[%s672 + $0x20] sm:$0xff]
    %v678 = vld [vmem:[%s672 + $0x28] sm:$0xff]
    %v679 = vld [vmem:[%s672 + $0x30] sm:$0xff]
    %v680 = vld [vmem:[%s672 + $0x38] sm:$0xff]
    %s681 = scalar_lea.vmem %s4, 2
    %v682 = vld [vmem:[%s681] sm:$0x1]
    %v684 = vlaneseq
    %v685 = vshrl.u32 %v684, 7
    %v686 = vsub.s32 0, %v685
    %v687 = vrot.slane %v682, %v686
    %v690 = vsel %vm296, %v278, 0
    %692 = vmatprep.subr.mxu0 0.0
    %693 = vmatpush1.msra.mxu0 %v673
    %694 = vmatprep.subr.mxu0 0.0
    %695 = vmatpush1.msra.mxu0 %v674
    %696 = vmatprep.subr.mxu0 0.0
    %697 = vmatpush1.msra.mxu0 %v675
    %698 = vmatprep.subr.mxu0 0.0
    %699 = vmatpush1.msra.mxu0 %v676
    %700 = vmatprep.subr.mxu0 0.0
    %701 = vmatpush1.msra.mxu0 %v677
    %702 = vmatprep.subr.mxu0 0.0
    %703 = vmatpush1.msra.mxu0 %v678
    %704 = vmatprep.subr.mxu0 0.0
    %705 = vmatpush1.msra.mxu0 %v679
    %706 = vmatprep.subr.mxu0 0.0
    %707 = vmatpush1.msra.mxu0 %v680
    %708 = vmatprep.subr.mxu0 0.0
    %709 = vmatpush1.msra.mxu0 0.0
    %710 = vmatprep.subr.mxu0 0.0
    %711 = vmatpush1.msra.mxu0 0.0
    %712 = vmatprep.subr.mxu0 0.0
    %713 = vmatpush1.msra.mxu0 0.0
    %714 = vmatprep.subr.mxu0 0.0
    %715 = vmatpush1.msra.mxu0 0.0
    %716 = vmatprep.subr.mxu0 0.0
    %717 = vmatpush1.msra.mxu0 0.0
    %718 = vmatprep.subr.mxu0 0.0
    %719 = vmatpush1.msra.mxu0 0.0
    %720 = vmatprep.subr.mxu0 0.0
    %721 = vmatpush1.msra.mxu0 0.0
    %722 = vmatprep.subr.mxu0 0.0
    %723 = vmatpush1.msra.mxu0 0.0
    %724 = vmatprep.subr.mxu0 0.0
    %725 = vmatpush1.msra.mxu0 0.0
    %726 = vmatprep.subr.mxu0 0.0
    %727 = vmatpush1.msra.mxu0 0.0
    %728 = vmatprep.subr.mxu0 0.0
    %729 = vmatpush1.msra.mxu0 0.0
    %730 = vmatprep.subr.mxu0 0.0
    %731 = vmatpush1.msra.mxu0 0.0
    %732 = vmatprep.subr.mxu0 0.0
    %733 = vmatpush1.msra.mxu0 0.0
    %734 = vmatprep.subr.mxu0 0.0
    %735 = vmatpush1.msra.mxu0 0.0
    %736 = vmatprep.subr.mxu0 0.0
    %737 = vmatpush1.msra.mxu0 0.0
    %738 = vmatprep.subr.mxu0 0.0
    %739 = vmatpush1.msra.mxu0 0.0
    %740 = vmatprep.subr.mxu0 0.0
    %741 = vmatpush1.msra.mxu0 0.0
    %742 = vmatprep.subr.mxu0 0.0
    %743 = vmatpush1.msra.mxu0 0.0
    %744 = vmatprep.subr.mxu0 0.0
    %745 = vmatpush1.msra.mxu0 0.0
    %746 = vmatprep.subr.mxu0 0.0
    %747 = vmatpush1.msra.mxu0 0.0
    %748 = vmatprep.subr.mxu0 0.0
    %749 = vmatpush1.msra.mxu0 0.0
    %750 = vmatprep.subr.mxu0 0.0
    %751 = vmatpush1.msra.mxu0 0.0
    %752 = vmatprep.subr.mxu0 0.0
    %753 = vmatpush1.msra.mxu0 0.0
    %754 = vmatprep.subr.mxu0 0.0
    %755 = vmatpush1.msra.mxu0 0.0
    %756 = vmatprep.mubr.f32.mxu0 0.0
    %757 = vmatmul.mubr.f32.gmra.mrb[0].mxu0 %v690
    %v758 = vpop.f32.mrb[0].mxu0
    %v759 = vadd.f32 %v687, %v758
    %v760 = vpop.f32.mrb[0].mxu0
    %761 = vdwg.mxu0
    %v762 = vmax.f32 %v759, 0.0
    %s763 = scalar_lea.vmem [#allocation7], 128
    %v764 = vld [vmem:[%s763] sm:$0xff]
    %v765 = vld [vmem:[%s763 + $0x8] sm:$0xff]
    %v766 = vld [vmem:[%s763 + $0x10] sm:$0xff]
    %v767 = vld [vmem:[%s763 + $0x18] sm:$0xff]
    %v768 = vld [vmem:[%s763 + $0x20] sm:$0xff]
    %v769 = vld [vmem:[%s763 + $0x28] sm:$0xff]
    %v770 = vld [vmem:[%s763 + $0x30] sm:$0xff]
    %v771 = vld [vmem:[%s763 + $0x38] sm:$0xff]
    %s772 = scalar_lea.vmem %s6, 2
    %v773 = vld [vmem:[%s772] sm:$0x1]
    %v775 = vlaneseq
    %v776 = vshrl.u32 %v775, 7
    %v777 = vsub.s32 0, %v776
    %v778 = vrot.slane %v773, %v777
    %v781 = vsel %vm296, %v762, 0
    %783 = vmatprep.subr.mxu0 0.0
    %784 = vmatpush1.msra.mxu0 %v764
    %785 = vmatprep.subr.mxu0 0.0
    %786 = vmatpush1.msra.mxu0 %v765
    %787 = vmatprep.subr.mxu0 0.0
    %788 = vmatpush1.msra.mxu0 %v766
    %789 = vmatprep.subr.mxu0 0.0
    %790 = vmatpush1.msra.mxu0 %v767
    %791 = vmatprep.subr.mxu0 0.0
    %792 = vmatpush1.msra.mxu0 %v768
    %793 = vmatprep.subr.mxu0 0.0
    %794 = vmatpush1.msra.mxu0 %v769
    %795 = vmatprep.subr.mxu0 0.0
    %796 = vmatpush1.msra.mxu0 %v770
    %797 = vmatprep.subr.mxu0 0.0
    %798 = vmatpush1.msra.mxu0 %v771
    %799 = vmatprep.subr.mxu0 0.0
    %800 = vmatpush1.msra.mxu0 0.0
    %801 = vmatprep.subr.mxu0 0.0
    %802 = vmatpush1.msra.mxu0 0.0
    %803 = vmatprep.subr.mxu0 0.0
    %804 = vmatpush1.msra.mxu0 0.0
    %805 = vmatprep.subr.mxu0 0.0
    %806 = vmatpush1.msra.mxu0 0.0
    %807 = vmatprep.subr.mxu0 0.0
    %808 = vmatpush1.msra.mxu0 0.0
    %809 = vmatprep.subr.mxu0 0.0
    %810 = vmatpush1.msra.mxu0 0.0
    %811 = vmatprep.subr.mxu0 0.0
    %812 = vmatpush1.msra.mxu0 0.0
    %813 = vmatprep.subr.mxu0 0.0
    %814 = vmatpush1.msra.mxu0 0.0
    %815 = vmatprep.subr.mxu0 0.0
    %816 = vmatpush1.msra.mxu0 0.0
    %817 = vmatprep.subr.mxu0 0.0
    %818 = vmatpush1.msra.mxu0 0.0
    %819 = vmatprep.subr.mxu0 0.0
    %820 = vmatpush1.msra.mxu0 0.0
    %821 = vmatprep.subr.mxu0 0.0
    %822 = vmatpush1.msra.mxu0 0.0
    %823 = vmatprep.subr.mxu0 0.0
    %824 = vmatpush1.msra.mxu0 0.0
    %825 = vmatprep.subr.mxu0 0.0
    %826 = vmatpush1.msra.mxu0 0.0
    %827 = vmatprep.subr.mxu0 0.0
    %828 = vmatpush1.msra.mxu0 0.0
    %829 = vmatprep.subr.mxu0 0.0
    %830 = vmatpush1.msra.mxu0 0.0
    %831 = vmatprep.subr.mxu0 0.0
    %832 = vmatpush1.msra.mxu0 0.0
    %833 = vmatprep.subr.mxu0 0.0
    %834 = vmatpush1.msra.mxu0 0.0
    %835 = vmatprep.subr.mxu0 0.0
    %836 = vmatpush1.msra.mxu0 0.0
    %837 = vmatprep.subr.mxu0 0.0
    %838 = vmatpush1.msra.mxu0 0.0
    %839 = vmatprep.subr.mxu0 0.0
    %840 = vmatpush1.msra.mxu0 0.0
    %841 = vmatprep.subr.mxu0 0.0
    %842 = vmatpush1.msra.mxu0 0.0
    %843 = vmatprep.subr.mxu0 0.0
    %844 = vmatpush1.msra.mxu0 0.0
    %845 = vmatprep.subr.mxu0 0.0
    %846 = vmatpush1.msra.mxu0 0.0
    %847 = vmatprep.mubr.f32.mxu0 0.0
    %848 = vmatmul.mubr.f32.gmra.mrb[0].mxu0 %v781
    %v849 = vpop.f32.mrb[0].mxu0
    %v850 = vadd.f32 %v778, %v849
    %v851 = vpop.f32.mrb[0].mxu0
    %852 = vdwg.mxu0
    %v853 = vmax.f32 %v850, 0.0
    %s854 = scalar_lea.vmem %s7, 2
    %v855 = vld [vmem:[%s854] sm:$0x1]
    %v857 = vlaneseq
    %v858 = vshrl.u32 %v857, 7
    %v859 = vsub.s32 0, %v858
    %v860 = vrot.slane %v855, %v859
    %v862 = vmul.f32 %v853, %v860
    %v863 = vsel %vm296, %v862, 0.0
    %864 = vadd.xlane.f32.xlu0 %v863
    %v865 = vpop.xlane.xlu0 %864
    %s866 = sadd.s32 %s280, 2
    %s867 = sld [smem:[#allocation8 + %s866]]
    %v868 = vstv %s867
    %v869 = vadd.f32 %v865, %v868
    %s870 = scalar_lea.vmem [#allocation5], 192
    %v871 = vld [vmem:[%s870] sm:$0xff]
    %v872 = vld [vmem:[%s870 + $0x8] sm:$0xff]
    %v873 = vld [vmem:[%s870 + $0x10] sm:$0xff]
    %v874 = vld [vmem:[%s870 + $0x18] sm:$0xff]
    %v875 = vld [vmem:[%s870 + $0x20] sm:$0xff]
    %v876 = vld [vmem:[%s870 + $0x28] sm:$0xff]
    %v877 = vld [vmem:[%s870 + $0x30] sm:$0xff]
    %v878 = vld [vmem:[%s870 + $0x38] sm:$0xff]
    %s879 = scalar_lea.vmem %s4, 3
    %v880 = vld [vmem:[%s879] sm:$0x1]
    %v882 = vlaneseq
    %v883 = vshrl.u32 %v882, 7
    %v884 = vsub.s32 0, %v883
    %v885 = vrot.slane %v880, %v884
    %v888 = vsel %vm296, %v279, 0
    %890 = vmatprep.subr.mxu0 0.0
    %891 = vmatpush1.msra.mxu0 %v871
    %892 = vmatprep.subr.mxu0 0.0
    %893 = vmatpush1.msra.mxu0 %v872
    %894 = vmatprep.subr.mxu0 0.0
    %895 = vmatpush1.msra.mxu0 %v873
    %896 = vmatprep.subr.mxu0 0.0
    %897 = vmatpush1.msra.mxu0 %v874
    %898 = vmatprep.subr.mxu0 0.0
    %899 = vmatpush1.msra.mxu0 %v875
    %900 = vmatprep.subr.mxu0 0.0
    %901 = vmatpush1.msra.mxu0 %v876
    %902 = vmatprep.subr.mxu0 0.0
    %903 = vmatpush1.msra.mxu0 %v877
    %904 = vmatprep.subr.mxu0 0.0
    %905 = vmatpush1.msra.mxu0 %v878
    %906 = vmatprep.subr.mxu0 0.0
    %907 = vmatpush1.msra.mxu0 0.0
    %908 = vmatprep.subr.mxu0 0.0
    %909 = vmatpush1.msra.mxu0 0.0
    %910 = vmatprep.subr.mxu0 0.0
    %911 = vmatpush1.msra.mxu0 0.0
    %912 = vmatprep.subr.mxu0 0.0
    %913 = vmatpush1.msra.mxu0 0.0
    %914 = vmatprep.subr.mxu0 0.0
    %915 = vmatpush1.msra.mxu0 0.0
    %916 = vmatprep.subr.mxu0 0.0
    %917 = vmatpush1.msra.mxu0 0.0
    %918 = vmatprep.subr.mxu0 0.0
    %919 = vmatpush1.msra.mxu0 0.0
    %920 = vmatprep.subr.mxu0 0.0
    %921 = vmatpush1.msra.mxu0 0.0
    %922 = vmatprep.subr.mxu0 0.0
    %923 = vmatpush1.msra.mxu0 0.0
    %924 = vmatprep.subr.mxu0 0.0
    %925 = vmatpush1.msra.mxu0 0.0
    %926 = vmatprep.subr.mxu0 0.0
    %927 = vmatpush1.msra.mxu0 0.0
    %928 = vmatprep.subr.mxu0 0.0
    %929 = vmatpush1.msra.mxu0 0.0
    %930 = vmatprep.subr.mxu0 0.0
    %931 = vmatpush1.msra.mxu0 0.0
    %932 = vmatprep.subr.mxu0 0.0
    %933 = vmatpush1.msra.mxu0 0.0
    %934 = vmatprep.subr.mxu0 0.0
    %935 = vmatpush1.msra.mxu0 0.0
    %936 = vmatprep.subr.mxu0 0.0
    %937 = vmatpush1.msra.mxu0 0.0
    %938 = vmatprep.subr.mxu0 0.0
    %939 = vmatpush1.msra.mxu0 0.0
    %940 = vmatprep.subr.mxu0 0.0
    %941 = vmatpush1.msra.mxu0 0.0
    %942 = vmatprep.subr.mxu0 0.0
    %943 = vmatpush1.msra.mxu0 0.0
    %944 = vmatprep.subr.mxu0 0.0
    %945 = vmatpush1.msra.mxu0 0.0
    %946 = vmatprep.subr.mxu0 0.0
    %947 = vmatpush1.msra.mxu0 0.0
    %948 = vmatprep.subr.mxu0 0.0
    %949 = vmatpush1.msra.mxu0 0.0
    %950 = vmatprep.subr.mxu0 0.0
    %951 = vmatpush1.msra.mxu0 0.0
    %952 = vmatprep.subr.mxu0 0.0
    %953 = vmatpush1.msra.mxu0 0.0
    %954 = vmatprep.mubr.f32.mxu0 0.0
    %955 = vmatmul.mubr.f32.gmra.mrb[0].mxu0 %v888
    %v956 = vpop.f32.mrb[0].mxu0
    %v957 = vadd.f32 %v885, %v956
    %v958 = vpop.f32.mrb[0].mxu0
    %959 = vdwg.mxu0
    %v960 = vmax.f32 %v957, 0.0
    %s961 = scalar_lea.vmem [#allocation7], 192
    %v962 = vld [vmem:[%s961] sm:$0xff]
    %v963 = vld [vmem:[%s961 + $0x8] sm:$0xff]
    %v964 = vld [vmem:[%s961 + $0x10] sm:$0xff]
    %v965 = vld [vmem:[%s961 + $0x18] sm:$0xff]
    %v966 = vld [vmem:[%s961 + $0x20] sm:$0xff]
    %v967 = vld [vmem:[%s961 + $0x28] sm:$0xff]
    %v968 = vld [vmem:[%s961 + $0x30] sm:$0xff]
    %v969 = vld [vmem:[%s961 + $0x38] sm:$0xff]
    %s970 = scalar_lea.vmem %s6, 3
    %v971 = vld [vmem:[%s970] sm:$0x1]
    %v973 = vlaneseq
    %v974 = vshrl.u32 %v973, 7
    %v975 = vsub.s32 0, %v974
    %v976 = vrot.slane %v971, %v975
    %v979 = vsel %vm296, %v960, 0
    %981 = vmatprep.subr.mxu0 0.0
    %982 = vmatpush1.msra.mxu0 %v962
    %983 = vmatprep.subr.mxu0 0.0
    %984 = vmatpush1.msra.mxu0 %v963
    %985 = vmatprep.subr.mxu0 0.0
    %986 = vmatpush1.msra.mxu0 %v964
    %987 = vmatprep.subr.mxu0 0.0
    %988 = vmatpush1.msra.mxu0 %v965
    %989 = vmatprep.subr.mxu0 0.0
    %990 = vmatpush1.msra.mxu0 %v966
    %991 = vmatprep.subr.mxu0 0.0
    %992 = vmatpush1.msra.mxu0 %v967
    %993 = vmatprep.subr.mxu0 0.0
    %994 = vmatpush1.msra.mxu0 %v968
    %995 = vmatprep.subr.mxu0 0.0
    %996 = vmatpush1.msra.mxu0 %v969
    %997 = vmatprep.subr.mxu0 0.0
    %998 = vmatpush1.msra.mxu0 0.0
    %999 = vmatprep.subr.mxu0 0.0
    %1000 = vmatpush1.msra.mxu0 0.0
    %1001 = vmatprep.subr.mxu0 0.0
    %1002 = vmatpush1.msra.mxu0 0.0
    %1003 = vmatprep.subr.mxu0 0.0
    %1004 = vmatpush1.msra.mxu0 0.0
    %1005 = vmatprep.subr.mxu0 0.0
    %1006 = vmatpush1.msra.mxu0 0.0
    %1007 = vmatprep.subr.mxu0 0.0
    %1008 = vmatpush1.msra.mxu0 0.0
    %1009 = vmatprep.subr.mxu0 0.0
    %1010 = vmatpush1.msra.mxu0 0.0
    %1011 = vmatprep.subr.mxu0 0.0
    %1012 = vmatpush1.msra.mxu0 0.0
    %1013 = vmatprep.subr.mxu0 0.0
    %1014 = vmatpush1.msra.mxu0 0.0
    %1015 = vmatprep.subr.mxu0 0.0
    %1016 = vmatpush1.msra.mxu0 0.0
    %1017 = vmatprep.subr.mxu0 0.0
    %1018 = vmatpush1.msra.mxu0 0.0
    %1019 = vmatprep.subr.mxu0 0.0
    %1020 = vmatpush1.msra.mxu0 0.0
    %1021 = vmatprep.subr.mxu0 0.0
    %1022 = vmatpush1.msra.mxu0 0.0
    %1023 = vmatprep.subr.mxu0 0.0
    %1024 = vmatpush1.msra.mxu0 0.0
    %1025 = vmatprep.subr.mxu0 0.0
    %1026 = vmatpush1.msra.mxu0 0.0
    %1027 = vmatprep.subr.mxu0 0.0
    %1028 = vmatpush1.msra.mxu0 0.0
    %1029 = vmatprep.subr.mxu0 0.0
    %1030 = vmatpush1.msra.mxu0 0.0
    %1031 = vmatprep.subr.mxu0 0.0
    %1032 = vmatpush1.msra.mxu0 0.0
    %1033 = vmatprep.subr.mxu0 0.0
    %1034 = vmatpush1.msra.mxu0 0.0
    %1035 = vmatprep.subr.mxu0 0.0
    %1036 = vmatpush1.msra.mxu0 0.0
    %1037 = vmatprep.subr.mxu0 0.0
    %1038 = vmatpush1.msra.mxu0 0.0
    %1039 = vmatprep.subr.mxu0 0.0
    %1040 = vmatpush1.msra.mxu0 0.0
    %1041 = vmatprep.subr.mxu0 0.0
    %1042 = vmatpush1.msra.mxu0 0.0
    %1043 = vmatprep.subr.mxu0 0.0
    %1044 = vmatpush1.msra.mxu0 0.0
    %1045 = vmatprep.mubr.f32.mxu0 0.0
    %1046 = vmatmul.mubr.f32.gmra.mrb[0].mxu0 %v979
    %v1047 = vpop.f32.mrb[0].mxu0
    %v1048 = vadd.f32 %v976, %v1047
    %v1049 = vpop.f32.mrb[0].mxu0
    %1050 = vdwg.mxu0
    %v1051 = vmax.f32 %v1048, 0.0
    %s1052 = scalar_lea.vmem %s7, 3
    %v1053 = vld [vmem:[%s1052] sm:$0x1]
    %v1055 = vlaneseq
    %v1056 = vshrl.u32 %v1055, 7
    %v1057 = vsub.s32 0, %v1056
    %v1058 = vrot.slane %v1053, %v1057
    %v1060 = vmul.f32 %v1051, %v1058
    %v1061 = vsel %vm296, %v1060, 0.0
    %1062 = vadd.xlane.f32.xlu0 %v1061
    %v1063 = vpop.xlane.xlu0 %1062
    %s1064 = sadd.s32 %s280, 3
    %s1065 = sld [smem:[#allocation8 + %s1064]]
    %v1066 = vstv %s1065
    %v1067 = vadd.f32 %v1063, %v1066
    %vm1068 = vcmask 7168
    %v1069 = vsel %vm1068, %v473, %v671
    %vm1070 = vcmask 15360
    %v1071 = vsel %vm1070, %v1069, %v869
    %vm1072 = vcmask 23552
    %v1073 = vsel %vm1072, %v1071, %v1067
    %vm1074 = vcmask 31744
    %1075 = vst.msk [vmem:[%s9] sm:$0xff] %vm1074, %v1073
    // Predicated region
    $region54: #{vectorized_critic_forward.1} parent=1 // pred_check
      _
    $region55: #{vectorized_critic_forward.1} parent=1 // pred_check_branch
      %1077 = sbr.rel (0) target = $region57
    $region56: #{vectorized_critic_forward.1} parent=1 // pred_region
      _
    $region57: #{vectorized_critic_forward.1} parent=1 // pred_fallthru
      _
    // Predicated region
    $region58: #{vectorized_critic_forward.1} parent=1 // pred_check
      _
    $region59: #{vectorized_critic_forward.1} parent=1 // pred_check_branch
      %1079 = sbr.rel (0) target = $region61
    $region60: #{vectorized_critic_forward.1} parent=1 // pred_region
      _
    $region61: #{vectorized_critic_forward.1} parent=1 // pred_fallthru
      _
    %1080 = vsyncpa [#allocation3], 1
    %1081 = vsyncpa [#allocation6], 1
    %1082 = vsyncpa [#allocation4], 1

</llo_original>
